<compile_context>
chip_gen: v7x
topology: tpu7x:2x2x1
jax: 0.10.0
libtpu: 0.0.40
codegen_flags: <defaults>
</compile_context>

<pallas_src>
import jax
import jax.numpy as jnp
from jax.experimental import pallas as pl
from jax.experimental.pallas import tpu as pltpu


# ----------------------------------------------------------------------------
# Small helpers
# ----------------------------------------------------------------------------
def _round_up(n, m):
    return ((n + m - 1) // m) * m


def _cdiv(a, b):
    return (a + b - 1) // b


def _pad2(a, rows, cols):
    return jnp.pad(a, ((0, rows - a.shape[0]), (0, cols - a.shape[1])))


# ----------------------------------------------------------------------------
# Kernel
# ----------------------------------------------------------------------------
def _actor_state_kernel(scale_ref,                       # SMEM (1,) f32
                        x_ref,                           # (tb, S_p)    bf16
                        w1_ref, b1_ref,                  # (S_p, H1_p) bf16 / (1, H1_p) f32
                        w2_ref, b2_ref,
                        w3_ref, b3_ref,
                        w4_ref, b4_ref,
                        o_ref):                          # (tb, A_p)    f32
    scale = scale_ref[0]

    def layer(h_bf16, w_ref, b_ref):
        # bf16 x bf16 on the MXU with f32 accumulation; bias add + ReLU stay
        # f32 on the VPU (v5e-safe), then a single pack back to bf16 for the
        # next layer's MXU pass.
        acc = jnp.dot(h_bf16, w_ref[...], preferred_element_type=jnp.float32)
        return jnp.maximum(acc + b_ref[...], 0.0).astype(jnp.bfloat16)

    h = layer(x_ref[...], w1_ref, b1_ref)
    h = layer(h,          w2_ref, b2_ref)
    h = layer(h,          w3_ref, b3_ref)
    y = jnp.dot(h, w4_ref[...], preferred_element_type=jnp.float32) + b4_ref[...]
    o_ref[...] = jnp.tanh(y) * scale                     # f32 tanh/scale (EUP/VPU)


# ----------------------------------------------------------------------------
# One-time parameter preparation (hoisted out of the forward path)
# ----------------------------------------------------------------------------
def prepare_params(params):
    """Zero-pad every feature dim to a lane multiple (128), cast weights to
    bf16 and biases to f32.  Done once at init; the forward only pads x."""
    S, H1 = params["W1"].shape
    H2 = params["W2"].shape[1]
    H3 = params["W3"].shape[1]
    A = params["W4"].shape[1]
    S_p, H1_p, H2_p, H3_p, A_p = (_round_up(d, 128) for d in (S, H1, H2, H3, A))

    prepped = {
        "W1": _pad2(params["W1"], S_p, H1_p).astype(jnp.bfloat16),
        "W2": _pad2(params["W2"], H1_p, H2_p).astype(jnp.bfloat16),
        "W3": _pad2(params["W3"], H2_p, H3_p).astype(jnp.bfloat16),
        "W4": _pad2(params["W4"], H3_p, A_p).astype(jnp.bfloat16),
        "b1": _pad2(params["b1"], 1, H1_p).astype(jnp.float32),
        "b2": _pad2(params["b2"], 1, H2_p).astype(jnp.float32),
        "b3": _pad2(params["b3"], 1, H3_p).astype(jnp.float32),
        "b4": _pad2(params["b4"], 1, A_p).astype(jnp.float32),
        "S": S, "A": A,
        "S_p": S_p, "H1_p": H1_p, "H2_p": H2_p, "H3_p": H3_p, "A_p": A_p,
    }
    # Materialize now so the pad/cast never re-runs per forward call.
    jax.block_until_ready([prepped[k] for k in ("W1", "W2", "W3", "W4",
                                                "b1", "b2", "b3", "b4")])
    return prepped


def _choose_batch_tile(B, batch_tile):
    """Pick (tile_rows, padded_batch): tile is a multiple of 8, capped at
    batch_tile, padding waste is at most ~8 rows per tile, and there are
    >= 2 grid steps whenever B > 8 (so v7x megacore sharding engages)."""
    B8 = _round_up(max(B, 1), 8)
    n_tiles = max(_cdiv(B8, batch_tile), 2 if B8 >= 16 else 1)
    tb = _round_up(_cdiv(B8, n_tiles), 8)
    return tb, n_tiles * tb


# ----------------------------------------------------------------------------
# Forward wrapper
# ----------------------------------------------------------------------------
def actor_state_forward(x, prepped, max_action, *, batch_tile=1024):
    """x: [B, state_dim] float32.  prepped: output of prepare_params()."""
    B, S = x.shape
    assert S == prepped["S"], "state_dim mismatch with prepared params"
    S_p, H1_p = prepped["S_p"], prepped["H1_p"]
    H2_p, H3_p, A_p = prepped["H2_p"], prepped["H3_p"], prepped["A_p"]
    A = prepped["A"]

    tb, B_p = _choose_batch_tile(B, batch_tile)

    # Only the activations are padded/cast per call (cheap); padded feature
    # columns hit zero weight rows, padded batch rows are sliced off.
    x_p = _pad2(x.astype(jnp.bfloat16), B_p, S_p)

    scale = jnp.asarray([max_action], dtype=jnp.float32)      # runtime SMEM scalar

    resident = lambda shape: pl.BlockSpec(shape, lambda i: (0, 0))  # VMEM-resident

    out = pl.pallas_call(
        _actor_state_kernel,
        out_shape=jax.ShapeDtypeStruct((B_p, A_p), jnp.float32),
        grid=(B_p // tb,),
        in_specs=[
            pl.BlockSpec(memory_space=pltpu.MemorySpace.SMEM),       # max_action
            pl.BlockSpec((tb, S_p), lambda i: (i, 0)),               # x tile
            resident((S_p, H1_p)), resident((1, H1_p)),              # W1, b1
            resident((H1_p, H2_p)), resident((1, H2_p)),             # W2, b2
            resident((H2_p, H3_p)), resident((1, H3_p)),             # W3, b3
            resident((H3_p, A_p)), resident((1, A_p)),               # W4, b4
        ],
        out_specs=pl.BlockSpec((tb, A_p), lambda i: (i, 0)),
        compiler_params=pltpu.CompilerParams(
            dimension_semantics=("parallel",)),
    )(scale, x_p,
      prepped["W1"], prepped["b1"], prepped["W2"], prepped["b2"],
      prepped["W3"], prepped["b3"], prepped["W4"], prepped["b4"])

    return out[:B, :A]


# ----------------------------------------------------------------------------
# Params (mirrors the PyTorch module's init: hidden_init on all Linear weights
# -> uniform(+-1/sqrt(out_features)); biases keep default uniform(+-1/sqrt(in))).
# ----------------------------------------------------------------------------
def make_params(key, state_dim, action_dim):
    dims = [(state_dim, 400), (400, 300), (300, 100), (100, action_dim)]
    params = {}
    keys = jax.random.split(key, 2 * len(dims))
    for i, (fin, fout) in enumerate(dims):
        w_lim = 1.0 / jnp.sqrt(jnp.float32(fout))   # hidden_init: fan = out_features
        b_lim = 1.0 / jnp.sqrt(jnp.float32(fin))    # default nn.Linear bias init
        params[f"W{i + 1}"] = jax.random.uniform(
            keys[2 * i], (fin, fout), jnp.float32, minval=-w_lim, maxval=w_lim)
        params[f"b{i + 1}"] = jax.random.uniform(
            keys[2 * i + 1], (1, fout), jnp.float32, minval=-b_lim, maxval=b_lim)
    return params


# ----------------------------------------------------------------------------
# References
# ----------------------------------------------------------------------------
def reference_forward_f32(x, params, max_action):
    """Pure f32 reference (matches the PyTorch module semantics)."""
    hp = jax.lax.Precision.HIGHEST
    h = jnp.maximum(jnp.dot(x, params["W1"], precision=hp) + params["b1"], 0.0)
    h = jnp.maximum(jnp.dot(h, params["W2"], precision=hp) + params["b2"], 0.0)
    h = jnp.maximum(jnp.dot(h, params["W3"], precision=hp) + params["b3"], 0.0)
    y = jnp.dot(h, params["W4"], precision=hp) + params["b4"]
    return jnp.tanh(y) * max_action


def reference_forward_bf16(x, params, max_action):
    """Mirrors the kernel's bf16-input / f32-accumulate matmuls."""
    hp = jax.lax.Precision.HIGHEST

    def lin(h, w, b):
        hq = h.astype(jnp.bfloat16).astype(jnp.float32)
        wq = w.astype(jnp.bfloat16).astype(jnp.float32)
        return jnp.dot(hq, wq, precision=hp) + b

    h = jnp.maximum(lin(x, params["W1"], params["b1"]), 0.0)
    h = jnp.maximum(lin(h, params["W2"], params["b2"]), 0.0)
    h = jnp.maximum(lin(h, params["W3"], params["b3"]), 0.0)
    y = lin(h, params["W4"], params["b4"])
    return jnp.tanh(y) * max_action


if __name__ == "__main__":
    key = jax.random.PRNGKey(0)
    k_param, k_x1, k_x2 = jax.random.split(key, 3)

    state_dim = 32
    action_dim = 4
    max_action = 2.0

    params = make_params(k_param, state_dim, action_dim)
    prepped = prepare_params(params)          # one-time pad + bf16 cast (hoisted)

    # Small latency-path batch (single grid step).
    x_small = jax.random.normal(k_x1, (8, state_dim), jnp.float32)
    out_small = jax.block_until_ready(actor_state_forward(x_small, prepped, max_action))
    assert out_small.shape == (8, action_dim)

    # Slightly larger batch exercising the multi-tile (>=2 grid steps) path.
    x_big = jax.random.normal(k_x2, (24, state_dim), jnp.float32)
    out_big = jax.block_until_ready(actor_state_forward(x_big, prepped, max_action))
    assert out_big.shape == (24, action_dim)

    for x, out in ((x_small, out_small), (x_big, out_big)):
        # Bit-level check vs. a reference mirroring the kernel's bf16 matmuls.
        ref_q = reference_forward_bf16(x, params, max_action)
        assert jnp.allclose(out, ref_q, atol=2e-3, rtol=2e-3), "mismatch vs bf16 reference"
        # Sanity check vs. the full-precision PyTorch-equivalent forward.
        ref_f32 = reference_forward_f32(x, params, max_action)
        assert jnp.allclose(out, ref_f32, atol=5e-2, rtol=5e-2), "mismatch vs f32 reference"

    print("KERNEL_OK")
</pallas_src>

<mosaic_0001>
module attributes {stable_mosaic.version = 11 : i64} {
  func.func @_actor_state_kernel(%arg0: i32, %arg1: memref<1xf32, #tpu.memory_space<smem>>, %arg2: memref<8x128xbf16, #tpu.memory_space<vmem>>, %arg3: memref<128x512xbf16, #tpu.memory_space<vmem>>, %arg4: memref<1x512xf32, #tpu.memory_space<vmem>>, %arg5: memref<512x384xbf16, #tpu.memory_space<vmem>>, %arg6: memref<1x384xf32, #tpu.memory_space<vmem>>, %arg7: memref<384x128xbf16, #tpu.memory_space<vmem>>, %arg8: memref<1x128xf32, #tpu.memory_space<vmem>>, %arg9: memref<128x128xbf16, #tpu.memory_space<vmem>>, %arg10: memref<1x128xf32, #tpu.memory_space<vmem>>, %arg11: memref<8x128xf32, #tpu.memory_space<vmem>>) attributes {dimension_semantics = [#tpu.dimension_semantics<parallel>], iteration_bounds = array<i64: 1>, scalar_prefetch = 0 : i64, scratch_operands = 0 : i64, tpu.core_type = #tpu.core_type<tc>, window_params = [{transform_indices = @transform_0, window_bounds = array<i64: 1>}, {transform_indices = @transform_1, window_bounds = array<i64: 8, 128>}, {pipeline_mode = #tpu.pipeline_mode<synchronous>, transform_indices = @transform_2, window_bounds = array<i64: 128, 512>}, {pipeline_mode = #tpu.pipeline_mode<synchronous>, transform_indices = @transform_3, window_bounds = array<i64: 1, 512>}, {pipeline_mode = #tpu.pipeline_mode<synchronous>, transform_indices = @transform_4, window_bounds = array<i64: 512, 384>}, {pipeline_mode = #tpu.pipeline_mode<synchronous>, transform_indices = @transform_5, window_bounds = array<i64: 1, 384>}, {pipeline_mode = #tpu.pipeline_mode<synchronous>, transform_indices = @transform_6, window_bounds = array<i64: 384, 128>}, {pipeline_mode = #tpu.pipeline_mode<synchronous>, transform_indices = @transform_7, window_bounds = array<i64: 1, 128>}, {pipeline_mode = #tpu.pipeline_mode<synchronous>, transform_indices = @transform_8, window_bounds = array<i64: 128, 128>}, {pipeline_mode = #tpu.pipeline_mode<synchronous>, transform_indices = @transform_9, window_bounds = array<i64: 1, 128>}, {transform_indices = @transform_10, window_bounds = array<i64: 8, 128>}]} {
    %c0 = arith.constant 0 : index
    %0 = memref.load %arg1[%c0] : memref<1xf32, #tpu.memory_space<smem>>
    %c0_0 = arith.constant 0 : index
    %c0_1 = arith.constant 0 : index
    %1 = vector.load %arg2[%c0_0, %c0_1] : memref<8x128xbf16, #tpu.memory_space<vmem>>, vector<8x128xbf16>
    %c0_2 = arith.constant 0 : index
    %c0_3 = arith.constant 0 : index
    %2 = vector.load %arg3[%c0_2, %c0_3] : memref<128x512xbf16, #tpu.memory_space<vmem>>, vector<128x512xbf16>
    %cst = arith.constant dense<0.000000e+00> : vector<8x512xf32>
    %3 = tpu.matmul %1, %2, %cst {dimension_numbers = #tpu.dot_dimension_numbers<[1], [0], [0], [1], [0, 0, 1, 1], [], []>} : vector<8x128xbf16>, vector<128x512xbf16>, vector<8x512xf32> -> vector<8x512xf32>
    %c0_4 = arith.constant 0 : index
    %c0_5 = arith.constant 0 : index
    %4 = vector.load %arg4[%c0_4, %c0_5] : memref<1x512xf32, #tpu.memory_space<vmem>>, vector<1x512xf32>
    %5 = vector.broadcast %4 : vector<1x512xf32> to vector<8x512xf32>
    %6 = arith.addf %3, %5 : vector<8x512xf32>
    %cst_6 = arith.constant 0.000000e+00 : f32
    %7 = vector.broadcast %cst_6 : f32 to vector<8x512xf32>
    %8 = arith.maximumf %6, %7 : vector<8x512xf32>
    %9 = arith.truncf %8 : vector<8x512xf32> to vector<8x512xbf16>
    %c0_7 = arith.constant 0 : index
    %c0_8 = arith.constant 0 : index
    %10 = vector.load %arg5[%c0_7, %c0_8] : memref<512x384xbf16, #tpu.memory_space<vmem>>, vector<512x384xbf16>
    %cst_9 = arith.constant dense<0.000000e+00> : vector<8x384xf32>
    %11 = tpu.matmul %9, %10, %cst_9 {dimension_numbers = #tpu.dot_dimension_numbers<[1], [0], [0], [1], [0, 0, 1, 1], [], []>} : vector<8x512xbf16>, vector<512x384xbf16>, vector<8x384xf32> -> vector<8x384xf32>
    %c0_10 = arith.constant 0 : index
    %c0_11 = arith.constant 0 : index
    %12 = vector.load %arg6[%c0_10, %c0_11] : memref<1x384xf32, #tpu.memory_space<vmem>>, vector<1x384xf32>
    %13 = vector.broadcast %12 : vector<1x384xf32> to vector<8x384xf32>
    %14 = arith.addf %11, %13 : vector<8x384xf32>
    %cst_12 = arith.constant 0.000000e+00 : f32
    %15 = vector.broadcast %cst_12 : f32 to vector<8x384xf32>
    %16 = arith.maximumf %14, %15 : vector<8x384xf32>
    %17 = arith.truncf %16 : vector<8x384xf32> to vector<8x384xbf16>
    %c0_13 = arith.constant 0 : index
    %c0_14 = arith.constant 0 : index
    %18 = vector.load %arg7[%c0_13, %c0_14] : memref<384x128xbf16, #tpu.memory_space<vmem>>, vector<384x128xbf16>
    %cst_15 = arith.constant dense<0.000000e+00> : vector<8x128xf32>
    %19 = tpu.matmul %17, %18, %cst_15 {dimension_numbers = #tpu.dot_dimension_numbers<[1], [0], [0], [1], [0, 0, 1, 1], [], []>} : vector<8x384xbf16>, vector<384x128xbf16>, vector<8x128xf32> -> vector<8x128xf32>
    %c0_16 = arith.constant 0 : index
    %c0_17 = arith.constant 0 : index
    %20 = vector.load %arg8[%c0_16, %c0_17] : memref<1x128xf32, #tpu.memory_space<vmem>>, vector<1x128xf32>
    %21 = vector.broadcast %20 : vector<1x128xf32> to vector<8x128xf32>
    %22 = arith.addf %19, %21 : vector<8x128xf32>
    %cst_18 = arith.constant 0.000000e+00 : f32
    %23 = vector.broadcast %cst_18 : f32 to vector<8x128xf32>
    %24 = arith.maximumf %22, %23 : vector<8x128xf32>
    %25 = arith.truncf %24 : vector<8x128xf32> to vector<8x128xbf16>
    %c0_19 = arith.constant 0 : index
    %c0_20 = arith.constant 0 : index
    %26 = vector.load %arg9[%c0_19, %c0_20] : memref<128x128xbf16, #tpu.memory_space<vmem>>, vector<128x128xbf16>
    %cst_21 = arith.constant dense<0.000000e+00> : vector<8x128xf32>
    %27 = tpu.matmul %25, %26, %cst_21 {dimension_numbers = #tpu.dot_dimension_numbers<[1], [0], [0], [1], [0, 0, 1, 1], [], []>} : vector<8x128xbf16>, vector<128x128xbf16>, vector<8x128xf32> -> vector<8x128xf32>
    %c0_22 = arith.constant 0 : index
    %c0_23 = arith.constant 0 : index
    %28 = vector.load %arg10[%c0_22, %c0_23] : memref<1x128xf32, #tpu.memory_space<vmem>>, vector<1x128xf32>
    %29 = vector.broadcast %28 : vector<1x128xf32> to vector<8x128xf32>
    %30 = arith.addf %27, %29 : vector<8x128xf32>
    %31 = math.tanh %30 : vector<8x128xf32>
    %32 = vector.broadcast %0 : f32 to vector<8x128xf32>
    %33 = arith.mulf %31, %32 : vector<8x128xf32>
    %c0_24 = arith.constant 0 : index
    %c0_25 = arith.constant 0 : index
    %34 = vector.load %arg11[%c0_24, %c0_25] : memref<8x128xf32, #tpu.memory_space<vmem>>, vector<8x128xf32>
    tpu.vector_store %arg11[%c0_24, %c0_25], %33 {strides = array<i32>} : memref<8x128xf32, #tpu.memory_space<vmem>>, vector<8x128xf32>,
    return
  }
  func.func @transform_0(%arg0: i32) -> i32 {
    %c0_i32 = arith.constant 0 : i32
    %c0_i32_0 = arith.constant 0 : i32
    return %c0_i32 : i32
  }
  func.func @transform_1(%arg0: i32) -> (i32, i32) {
    %c0_i32 = arith.constant 0 : i32
    %c0_i32_0 = arith.constant 0 : i32
    return %arg0, %c0_i32 : i32, i32
  }
  func.func @transform_2(%arg0: i32) -> (i32, i32) {
    %c0_i32 = arith.constant 0 : i32
    %c0_i32_0 = arith.constant 0 : i32
    %c0_i32_1 = arith.constant 0 : i32
    return %c0_i32, %c0_i32_0 : i32, i32
  }
  func.func @transform_3(%arg0: i32) -> (i32, i32) {
    %c0_i32 = arith.constant 0 : i32
    %c0_i32_0 = arith.constant 0 : i32
    %c0_i32_1 = arith.constant 0 : i32
    return %c0_i32, %c0_i32_0 : i32, i32
  }
  func.func @transform_4(%arg0: i32) -> (i32, i32) {
    %c0_i32 = arith.constant 0 : i32
    %c0_i32_0 = arith.constant 0 : i32
    %c0_i32_1 = arith.constant 0 : i32
    return %c0_i32, %c0_i32_0 : i32, i32
  }
  func.func @transform_5(%arg0: i32) -> (i32, i32) {
    %c0_i32 = arith.constant 0 : i32
    %c0_i32_0 = arith.constant 0 : i32
    %c0_i32_1 = arith.constant 0 : i32
    return %c0_i32, %c0_i32_0 : i32, i32
  }
  func.func @transform_6(%arg0: i32) -> (i32, i32) {
    %c0_i32 = arith.constant 0 : i32
    %c0_i32_0 = arith.constant 0 : i32
    %c0_i32_1 = arith.constant 0 : i32
    return %c0_i32, %c0_i32_0 : i32, i32
  }
  func.func @transform_7(%arg0: i32) -> (i32, i32) {
    %c0_i32 = arith.constant 0 : i32
    %c0_i32_0 = arith.constant 0 : i32
    %c0_i32_1 = arith.constant 0 : i32
    return %c0_i32, %c0_i32_0 : i32, i32
  }
  func.func @transform_8(%arg0: i32) -> (i32, i32) {
    %c0_i32 = arith.constant 0 : i32
    %c0_i32_0 = arith.constant 0 : i32
    %c0_i32_1 = arith.constant 0 : i32
    return %c0_i32, %c0_i32_0 : i32, i32
  }
  func.func @transform_9(%arg0: i32) -> (i32, i32) {
    %c0_i32 = arith.constant 0 : i32
    %c0_i32_0 = arith.constant 0 : i32
    %c0_i32_1 = arith.constant 0 : i32
    return %c0_i32, %c0_i32_0 : i32, i32
  }
  func.func @transform_10(%arg0: i32) -> (i32, i32) {
    %c0_i32 = arith.constant 0 : i32
    %c0_i32_0 = arith.constant 0 : i32
    return %arg0, %c0_i32 : i32, i32
  }
}

</mosaic_0001>

<llo_original>
// kernel: tpu_custom_call.1
$region0: #{tpu_custom_call.1}
  #allocation0 [shape = 'u32[]', space=smem, size = 0x4, offset = 0x4, fixed_abs, tag = 'smem constant byte address 0x4 - core index']
  #allocation1 [shape = 'u32[144,128]{1,0:T(1,128)}', space=vmem, size = 0x12000, scoped, tag = 'internal scratch']
  #allocation2 [shape = 'f32[1]{0:T(128)S(6)}', space=smem, size = 0x200, scoped, tag = 'scoped memory for tpu_custom_call.1']
  %s0 = inlined_call_operand.<no memory space> [shape: f32[1], index: 0, kind: input, shape index: {}]
  %s1 = inlined_call_operand.hbm [shape: bf16[8,128], index: 1, kind: input, shape index: {}]
  %s2 = inlined_call_operand.hbm [shape: bf16[128,512], index: 2, kind: input, shape index: {}]
  %s3 = inlined_call_operand.vmem [shape: f32[1,512], index: 3, kind: input, shape index: {}]
  %s4 = inlined_call_operand.hbm [shape: bf16[512,384], index: 4, kind: input, shape index: {}]
  %s5 = inlined_call_operand.vmem [shape: f32[1,384], index: 5, kind: input, shape index: {}]
  %s6 = inlined_call_operand.hbm [shape: bf16[384,128], index: 6, kind: input, shape index: {}]
  %s7 = inlined_call_operand.vmem [shape: f32[1,128], index: 7, kind: input, shape index: {}]
  %s8 = inlined_call_operand.hbm [shape: bf16[128,128], index: 8, kind: input, shape index: {}]
  %s9 = inlined_call_operand.vmem [shape: f32[1,128], index: 9, kind: input, shape index: {}]
  %s10 = inlined_call_operand.hbm [shape: f32[8,128], index: 10, kind: output, shape index: {}]
  %s11 = sld [smem:[#allocation0]]
  $region70: #{tpu_custom_call.1} parent=0
    _
  %s13 = ssub.s32 1, %s11
  %s14 = scalar_select 0, %s13, %s11
  %15 = sst [smem:[#allocation2]] %s0
  $region1: #{tpu_custom_call.1} parent=0
    #allocation3 [shape = 'u8[2048]{0}', space=vmem, size = 0x800, scoped, tag = 'input window, operand 1, single buffered']
    #allocation4 [shape = 's32[1]{0}', space=sflag, size = 0x4, scoped, tag = 'scoped memory for tpu_custom_call.1']
    #allocation5 [shape = 's32[1]{0}', space=sflag, size = 0x4, scoped, tag = 'scoped memory for tpu_custom_call.1']
    #allocation6 [shape = 'u8[131072]{0}', space=vmem, size = 0x20000, scoped, tag = 'input window, operand 2, single buffered']
    #allocation7 [shape = 's32[1]{0}', space=sflag, size = 0x4, scoped, tag = 'scoped memory for tpu_custom_call.1']
    #allocation8 [shape = 'u8[393216]{0}', space=vmem, size = 0x60000, scoped, tag = 'input window, operand 4, single buffered']
    #allocation9 [shape = 'u8[98304]{0}', space=vmem, size = 0x18000, scoped, tag = 'input window, operand 6, single buffered']
    #allocation10 [shape = 's32[1]{0}', space=sflag, size = 0x4, scoped, tag = 'scoped memory for tpu_custom_call.1']
    #allocation11 [shape = 'u8[32768]{0}', space=vmem, size = 0x8000, scoped, tag = 'input window, operand 8, single buffered']
    #allocation12 [shape = 'u8[4096]{0}', space=vmem, size = 0x1000, scoped, tag = 'output window, operand 0, single buffered']
    %16 = vsyncpa [#allocation4], 0
    %17 = vsyncpa [#allocation7], 0
    %18 = vsyncpa [#allocation10], 0
    %19 = vsyncpa [#allocation5], 0
    // Predicated region
    $region2: #{tpu_custom_call.1} parent=1 // pred_check
      _
    $region3: #{tpu_custom_call.1} parent=1 // pred_check_branch
      %21 = sbr.rel (0) target = $region5
    $region4: #{tpu_custom_call.1} parent=1 // pred_region
      _
    $region5: #{tpu_custom_call.1} parent=1 // pred_fallthru
      _
    // Predicated region
    $region6: #{tpu_custom_call.1} parent=1 // pred_check
      _
    $region7: #{tpu_custom_call.1} parent=1 // pred_check_branch
      %23 = sbr.rel (0) target = $region9
    $region8: #{tpu_custom_call.1} parent=1 // pred_region
      %s25 = ssub.s32 64, 64
      %26 = vsyncadd [#allocation4], %s25
      %s28 = sshll.u32 [#allocation3], 4
      %s29 = int_to_ptr.vmem [resolvable:$true] %s28
      %31 = dma.hbm_to_vmem [thread:$0]  %s1, 64, %s29, [#allocation4]
    $region9: #{tpu_custom_call.1} parent=1 // pred_fallthru
      _
    // Predicated region
    $region10: #{tpu_custom_call.1} parent=1 // pred_check
      _
    $region11: #{tpu_custom_call.1} parent=1 // pred_check_branch
      %33 = sbr.rel (0) target = $region13
    $region12: #{tpu_custom_call.1} parent=1 // pred_region
      %s35 = ssub.s32 4096, 4096
      %36 = vsyncadd [#allocation7], %s35
      %s37 = sshll.u32 [#allocation6], 4
      %s38 = int_to_ptr.vmem [resolvable:$true] %s37
      %43 = dma.hbm_to_vmem [thread:$0]  %s2, 4096, %s38, [#allocation7], 256, 256, 16
    $region13: #{tpu_custom_call.1} parent=1 // pred_fallthru
      _
    // Predicated region
    $region14: #{tpu_custom_call.1} parent=1 // pred_check
      _
    $region15: #{tpu_custom_call.1} parent=1 // pred_check_branch
      %45 = sbr.rel (0) target = $region17
    $region16: #{tpu_custom_call.1} parent=1 // pred_region
      _
    $region17: #{tpu_custom_call.1} parent=1 // pred_fallthru
      _
    // Predicated region
    $region18: #{tpu_custom_call.1} parent=1 // pred_check
      _
    $region19: #{tpu_custom_call.1} parent=1 // pred_check_branch
      %47 = sbr.rel (0) target = $region21
    $region20: #{tpu_custom_call.1} parent=1 // pred_region
      %s49 = ssub.s32 12288, 12288
      %50 = vsyncadd [#allocation7], %s49
      %s51 = sshll.u32 [#allocation8], 4
      %s52 = int_to_ptr.vmem [resolvable:$true] %s51
      %57 = dma.hbm_to_vmem [thread:$0]  %s4, 12288, %s52, [#allocation7], 192, 192, 12
    $region21: #{tpu_custom_call.1} parent=1 // pred_fallthru
      _
    // Predicated region
    $region22: #{tpu_custom_call.1} parent=1 // pred_check
      _
    $region23: #{tpu_custom_call.1} parent=1 // pred_check_branch
      %59 = sbr.rel (0) target = $region25
    $region24: #{tpu_custom_call.1} parent=1 // pred_region
      _
    $region25: #{tpu_custom_call.1} parent=1 // pred_fallthru
      _
    // Predicated region
    $region26: #{tpu_custom_call.1} parent=1 // pred_check
      _
    $region27: #{tpu_custom_call.1} parent=1 // pred_check_branch
      %61 = sbr.rel (0) target = $region29
    $region28: #{tpu_custom_call.1} parent=1 // pred_region
      %s63 = ssub.s32 3072, 3072
      %64 = vsyncadd [#allocation10], %s63
      %s65 = sshll.u32 [#allocation9], 4
      %s66 = int_to_ptr.vmem [resolvable:$true] %s65
      %71 = dma.hbm_to_vmem [thread:$0]  %s6, 3072, %s66, [#allocation10], 64, 64, 4
    $region29: #{tpu_custom_call.1} parent=1 // pred_fallthru
      _
    // Predicated region
    $region30: #{tpu_custom_call.1} parent=1 // pred_check
      _
    $region31: #{tpu_custom_call.1} parent=1 // pred_check_branch
      %73 = sbr.rel (0) target = $region33
    $region32: #{tpu_custom_call.1} parent=1 // pred_region
      _
    $region33: #{tpu_custom_call.1} parent=1 // pred_fallthru
      _
    // Predicated region
    $region34: #{tpu_custom_call.1} parent=1 // pred_check
      _
    $region35: #{tpu_custom_call.1} parent=1 // pred_check_branch
      %75 = sbr.rel (0) target = $region37
    $region36: #{tpu_custom_call.1} parent=1 // pred_region
      %s77 = ssub.s32 1024, 1024
      %78 = vsyncadd [#allocation10], %s77
      %s79 = sshll.u32 [#allocation11], 4
      %s80 = int_to_ptr.vmem [resolvable:$true] %s79
      %85 = dma.hbm_to_vmem [thread:$0]  %s8, 1024, %s80, [#allocation10], 64, 64, 4
    $region37: #{tpu_custom_call.1} parent=1 // pred_fallthru
      _
    // Predicated region
    $region38: #{tpu_custom_call.1} parent=1 // pred_check
      _
    $region39: #{tpu_custom_call.1} parent=1 // pred_check_branch
      %87 = sbr.rel (0) target = $region41
    $region40: #{tpu_custom_call.1} parent=1 // pred_region
      _
    $region41: #{tpu_custom_call.1} parent=1 // pred_fallthru
      _
    // Predicated region
    $region42: #{tpu_custom_call.1} parent=1 // pred_check
      _
    $region43: #{tpu_custom_call.1} parent=1 // pred_check_branch
      %89 = sbr.rel (0) target = $region45
    $region44: #{tpu_custom_call.1} parent=1 // pred_region
      %90 = dma.done [#allocation4], 64
    $region45: #{tpu_custom_call.1} parent=1 // pred_fallthru
      _
    // Predicated region
    $region46: #{tpu_custom_call.1} parent=1 // pred_check
      _
    $region47: #{tpu_custom_call.1} parent=1 // pred_check_branch
      %92 = sbr.rel (0) target = $region49
    $region48: #{tpu_custom_call.1} parent=1 // pred_region
      %93 = dma.done [#allocation7], 4096
    $region49: #{tpu_custom_call.1} parent=1 // pred_fallthru
      _
    // Predicated region
    $region50: #{tpu_custom_call.1} parent=1 // pred_check
      _
    $region51: #{tpu_custom_call.1} parent=1 // pred_check_branch
      %95 = sbr.rel (0) target = $region53
    $region52: #{tpu_custom_call.1} parent=1 // pred_region
      %96 = dma.done [#allocation7], 12288
    $region53: #{tpu_custom_call.1} parent=1 // pred_fallthru
      _
    // Predicated region
    $region54: #{tpu_custom_call.1} parent=1 // pred_check
      _
    $region55: #{tpu_custom_call.1} parent=1 // pred_check_branch
      %98 = sbr.rel (0) target = $region57
    $region56: #{tpu_custom_call.1} parent=1 // pred_region
      %99 = dma.done [#allocation10], 3072
    $region57: #{tpu_custom_call.1} parent=1 // pred_fallthru
      _
    // Predicated region
    $region58: #{tpu_custom_call.1} parent=1 // pred_check
      _
    $region59: #{tpu_custom_call.1} parent=1 // pred_check_branch
      %101 = sbr.rel (0) target = $region61
    $region60: #{tpu_custom_call.1} parent=1 // pred_region
      %102 = dma.done [#allocation10], 1024
    $region61: #{tpu_custom_call.1} parent=1 // pred_fallthru
      _
    %s104 = sld [smem:[#allocation2]]
    %v105 = vld [vmem:[#allocation3] sm:$0xf]
    %v106 = vld [vmem:[#allocation6] sm:$0xff]
    %v107 = vld [vmem:[#allocation6 + $0x8] sm:$0xff]
    %v108 = vld [vmem:[#allocation6 + $0x10] sm:$0xff]
    %v109 = vld [vmem:[#allocation6 + $0x18] sm:$0xff]
    %v110 = vld [vmem:[#allocation6 + $0x20] sm:$0xff]
    %v111 = vld [vmem:[#allocation6 + $0x28] sm:$0xff]
    %v112 = vld [vmem:[#allocation6 + $0x30] sm:$0xff]
    %v113 = vld [vmem:[#allocation6 + $0x38] sm:$0xff]
    %v114 = vld [vmem:[#allocation6 + $0x40] sm:$0xff]
    %v115 = vld [vmem:[#allocation6 + $0x48] sm:$0xff]
    %v116 = vld [vmem:[#allocation6 + $0x50] sm:$0xff]
    %v117 = vld [vmem:[#allocation6 + $0x58] sm:$0xff]
    %v118 = vld [vmem:[#allocation6 + $0x60] sm:$0xff]
    %v119 = vld [vmem:[#allocation6 + $0x68] sm:$0xff]
    %v120 = vld [vmem:[#allocation6 + $0x70] sm:$0xff]
    %v121 = vld [vmem:[#allocation6 + $0x78] sm:$0xff]
    %v122 = vld [vmem:[#allocation6 + $0x80] sm:$0xff]
    %v123 = vld [vmem:[#allocation6 + $0x88] sm:$0xff]
    %v124 = vld [vmem:[#allocation6 + $0x90] sm:$0xff]
    %v125 = vld [vmem:[#allocation6 + $0x98] sm:$0xff]
    %v126 = vld [vmem:[#allocation6 + $0xa0] sm:$0xff]
    %v127 = vld [vmem:[#allocation6 + $0xa8] sm:$0xff]
    %v128 = vld [vmem:[#allocation6 + $0xb0] sm:$0xff]
    %v129 = vld [vmem:[#allocation6 + $0xb8] sm:$0xff]
    %v130 = vld [vmem:[#allocation6 + $0xc0] sm:$0xff]
    %v131 = vld [vmem:[#allocation6 + $0xc8] sm:$0xff]
    %v132 = vld [vmem:[#allocation6 + $0xd0] sm:$0xff]
    %v133 = vld [vmem:[#allocation6 + $0xd8] sm:$0xff]
    %v134 = vld [vmem:[#allocation6 + $0xe0] sm:$0xff]
    %v135 = vld [vmem:[#allocation6 + $0xe8] sm:$0xff]
    %v136 = vld [vmem:[#allocation6 + $0xf0] sm:$0xff]
    %v137 = vld [vmem:[#allocation6 + $0xf8] sm:$0xff]
    %v138 = vld [vmem:[%s3] sm:$0xf]
    %v140 = vlaneseq
    %v141 = vshrl.u32 %v140, 7
    %v142 = vsub.s32 0, %v141
    %v143 = vrot.slane %v138, %v142
    %v144 = vlaneseq
    %v145 = vshrl.u32 %v144, 7
    %v146 = vsub.s32 1, %v145
    %v147 = vrot.slane %v138, %v146
    %v148 = vlaneseq
    %v149 = vshrl.u32 %v148, 7
    %v150 = vsub.s32 2, %v149
    %v151 = vrot.slane %v138, %v150
    %v152 = vlaneseq
    %v153 = vshrl.u32 %v152, 7
    %v154 = vsub.s32 3, %v153
    %v155 = vrot.slane %v138, %v154
    %v192 = vunpack.c.l.b16 %v106
    %v193 = vunpack.c.h.b16 %v106
    %v194 = vunpack.c.l.b16 %v107
    %v195 = vunpack.c.h.b16 %v107
    %v196 = vunpack.c.l.b16 %v108
    %v197 = vunpack.c.h.b16 %v108
    %v198 = vunpack.c.l.b16 %v109
    %v199 = vunpack.c.h.b16 %v109
    %v200 = vunpack.c.l.b16 %v110
    %v201 = vunpack.c.h.b16 %v110
    %v202 = vunpack.c.l.b16 %v111
    %v203 = vunpack.c.h.b16 %v111
    %v204 = vunpack.c.l.b16 %v112
    %v205 = vunpack.c.h.b16 %v112
    %v206 = vunpack.c.l.b16 %v113
    %v207 = vunpack.c.h.b16 %v113
    %v208 = vunpack.c.l.b16 %v114
    %v209 = vunpack.c.h.b16 %v114
    %v210 = vunpack.c.l.b16 %v115
    %v211 = vunpack.c.h.b16 %v115
    %v212 = vunpack.c.l.b16 %v116
    %v213 = vunpack.c.h.b16 %v116
    %v214 = vunpack.c.l.b16 %v117
    %v215 = vunpack.c.h.b16 %v117
    %v216 = vunpack.c.l.b16 %v118
    %v217 = vunpack.c.h.b16 %v118
    %v218 = vunpack.c.l.b16 %v119
    %v219 = vunpack.c.h.b16 %v119
    %v220 = vunpack.c.l.b16 %v120
    %v221 = vunpack.c.h.b16 %v120
    %v222 = vunpack.c.l.b16 %v121
    %v223 = vunpack.c.h.b16 %v121
    %v224 = vunpack.c.l.b16 %v122
    %v225 = vunpack.c.h.b16 %v122
    %v226 = vunpack.c.l.b16 %v123
    %v227 = vunpack.c.h.b16 %v123
    %v228 = vunpack.c.l.b16 %v124
    %v229 = vunpack.c.h.b16 %v124
    %v230 = vunpack.c.l.b16 %v125
    %v231 = vunpack.c.h.b16 %v125
    %v232 = vunpack.c.l.b16 %v126
    %v233 = vunpack.c.h.b16 %v126
    %v234 = vunpack.c.l.b16 %v127
    %v235 = vunpack.c.h.b16 %v127
    %v236 = vunpack.c.l.b16 %v128
    %v237 = vunpack.c.h.b16 %v128
    %v238 = vunpack.c.l.b16 %v129
    %v239 = vunpack.c.h.b16 %v129
    %v240 = vunpack.c.l.b16 %v130
    %v241 = vunpack.c.h.b16 %v130
    %v242 = vunpack.c.l.b16 %v131
    %v243 = vunpack.c.h.b16 %v131
    %v244 = vunpack.c.l.b16 %v132
    %v245 = vunpack.c.h.b16 %v132
    %v246 = vunpack.c.l.b16 %v133
    %v247 = vunpack.c.h.b16 %v133
    %v248 = vunpack.c.l.b16 %v134
    %v249 = vunpack.c.h.b16 %v134
    %v250 = vunpack.c.l.b16 %v135
    %v251 = vunpack.c.h.b16 %v135
    %v252 = vunpack.c.l.b16 %v136
    %v253 = vunpack.c.h.b16 %v136
    %v254 = vunpack.c.l.b16 %v137
    %v255 = vunpack.c.h.b16 %v137
    %v256 = vpack.c.b16 %v196, %v192
    %v257 = vpack.c.b16 %v197, %v193
    %v258 = vpack.c.b16 %v198, %v194
    %v259 = vpack.c.b16 %v199, %v195
    %v260 = vpack.c.b16 %v204, %v200
    %v261 = vpack.c.b16 %v205, %v201
    %v262 = vpack.c.b16 %v206, %v202
    %v263 = vpack.c.b16 %v207, %v203
    %v264 = vpack.c.b16 %v212, %v208
    %v265 = vpack.c.b16 %v213, %v209
    %v266 = vpack.c.b16 %v214, %v210
    %v267 = vpack.c.b16 %v215, %v211
    %v268 = vpack.c.b16 %v220, %v216
    %v269 = vpack.c.b16 %v221, %v217
    %v270 = vpack.c.b16 %v222, %v218
    %v271 = vpack.c.b16 %v223, %v219
    %v272 = vpack.c.b16 %v228, %v224
    %v273 = vpack.c.b16 %v229, %v225
    %v274 = vpack.c.b16 %v230, %v226
    %v275 = vpack.c.b16 %v231, %v227
    %v276 = vpack.c.b16 %v236, %v232
    %v277 = vpack.c.b16 %v237, %v233
    %v278 = vpack.c.b16 %v238, %v234
    %v279 = vpack.c.b16 %v239, %v235
    %v280 = vpack.c.b16 %v244, %v240
    %v281 = vpack.c.b16 %v245, %v241
    %v282 = vpack.c.b16 %v246, %v242
    %v283 = vpack.c.b16 %v247, %v243
    %v284 = vpack.c.b16 %v252, %v248
    %v285 = vpack.c.b16 %v253, %v249
    %v286 = vpack.c.b16 %v254, %v250
    %v287 = vpack.c.b16 %v255, %v251
    %320 = vmatprep.subr.bf16.mxu0 %v257
    %321 = vmatpush1.bf16.msra.mxu0 %v256
    %322 = vmatprep.subr.bf16.mxu0 %v261
    %323 = vmatpush1.bf16.msra.mxu0 %v260
    %324 = vmatprep.subr.bf16.mxu0 %v265
    %325 = vmatpush1.bf16.msra.mxu0 %v264
    %326 = vmatprep.subr.bf16.mxu0 %v269
    %327 = vmatpush1.bf16.msra.mxu0 %v268
    %328 = vmatprep.subr.bf16.mxu0 %v273
    %329 = vmatpush1.bf16.msra.mxu0 %v272
    %330 = vmatprep.subr.bf16.mxu0 %v277
    %331 = vmatpush1.bf16.msra.mxu0 %v276
    %332 = vmatprep.subr.bf16.mxu0 %v281
    %333 = vmatpush1.bf16.msra.mxu0 %v280
    %334 = vmatprep.subr.bf16.mxu0 %v285
    %335 = vmatpush1.bf16.msra.mxu0 %v284
    %336 = vmatprep.subr.bf16.mxu0 0
    %337 = vmatpush1.bf16.msra.mxu0 0
    %338 = vmatprep.subr.bf16.mxu0 0
    %339 = vmatpush1.bf16.msra.mxu0 0
    %340 = vmatprep.subr.bf16.mxu0 0
    %341 = vmatpush1.bf16.msra.mxu0 0
    %342 = vmatprep.subr.bf16.mxu0 0
    %343 = vmatpush1.bf16.msra.mxu0 0
    %344 = vmatprep.subr.bf16.mxu0 0
    %345 = vmatpush1.bf16.msra.mxu0 0
    %346 = vmatprep.subr.bf16.mxu0 0
    %347 = vmatpush1.bf16.msra.mxu0 0
    %348 = vmatprep.subr.bf16.mxu0 0
    %349 = vmatpush1.bf16.msra.mxu0 0
    %350 = vmatprep.subr.bf16.mxu0 0
    %351 = vmatpush1.bf16.msra.mxu0 0
    %352 = vmatprep.mubr.bf16.mxu0 0
    %353 = vmatmul.mubr.bf16.gmra.mrb[0].mxu0 %v105
    %v354 = vpop.f32.mrb[0].mxu0
    %v355 = vadd.f32 %v143, %v354
    %v356 = vpop.f32.mrb[0].mxu0
    %v357 = vadd.f32 %v147, %v356
    %v358 = vpop.f32.mrb[0].mxu0
    %v359 = vpop.f32.mrb[0].mxu0
    %360 = vdwg.mxu0
    %361 = vmatprep.subr.bf16.mxu0 %v259
    %362 = vmatpush1.bf16.msra.mxu0 %v258
    %363 = vmatprep.subr.bf16.mxu0 %v263
    %364 = vmatpush1.bf16.msra.mxu0 %v262
    %365 = vmatprep.subr.bf16.mxu0 %v267
    %366 = vmatpush1.bf16.msra.mxu0 %v266
    %367 = vmatprep.subr.bf16.mxu0 %v271
    %368 = vmatpush1.bf16.msra.mxu0 %v270
    %369 = vmatprep.subr.bf16.mxu0 %v275
    %370 = vmatpush1.bf16.msra.mxu0 %v274
    %371 = vmatprep.subr.bf16.mxu0 %v279
    %372 = vmatpush1.bf16.msra.mxu0 %v278
    %373 = vmatprep.subr.bf16.mxu0 %v283
    %374 = vmatpush1.bf16.msra.mxu0 %v282
    %375 = vmatprep.subr.bf16.mxu0 %v287
    %376 = vmatpush1.bf16.msra.mxu0 %v286
    %377 = vmatprep.subr.bf16.mxu0 0
    %378 = vmatpush1.bf16.msra.mxu0 0
    %379 = vmatprep.subr.bf16.mxu0 0
    %380 = vmatpush1.bf16.msra.mxu0 0
    %381 = vmatprep.subr.bf16.mxu0 0
    %382 = vmatpush1.bf16.msra.mxu0 0
    %383 = vmatprep.subr.bf16.mxu0 0
    %384 = vmatpush1.bf16.msra.mxu0 0
    %385 = vmatprep.subr.bf16.mxu0 0
    %386 = vmatpush1.bf16.msra.mxu0 0
    %387 = vmatprep.subr.bf16.mxu0 0
    %388 = vmatpush1.bf16.msra.mxu0 0
    %389 = vmatprep.subr.bf16.mxu0 0
    %390 = vmatpush1.bf16.msra.mxu0 0
    %391 = vmatprep.subr.bf16.mxu0 0
    %392 = vmatpush1.bf16.msra.mxu0 0
    %393 = vmatprep.mubr.bf16.mxu0 0
    %394 = vmatmul.mubr.bf16.gmra.mrb[0].mxu0 %v105
    %v395 = vpop.f32.mrb[0].mxu0
    %v396 = vadd.f32 %v151, %v395
    %v397 = vpop.f32.mrb[0].mxu0
    %v398 = vadd.f32 %v155, %v397
    %v399 = vpop.f32.mrb[0].mxu0
    %v400 = vpop.f32.mrb[0].mxu0
    %401 = vdwg.mxu0
    %v402 = vmax.f32 %v355, 0.0
    %v403 = vmax.f32 %v357, 0.0
    %v404 = vmax.f32 %v396, 0.0
    %v405 = vmax.f32 %v398, 0.0
    %v406 = vpack.c.bf16 %v402, %v402
    %v407 = vpack.c.bf16 %v403, %v403
    %v408 = vpack.c.bf16 %v404, %v404
    %v409 = vpack.c.bf16 %v405, %v405
    %v410 = vld [vmem:[#allocation8] sm:$0xff]
    %v411 = vld [vmem:[#allocation8 + $0x8] sm:$0xf]
    %v412 = vld [vmem:[#allocation8 + $0xc] sm:$0xff]
    %v413 = vld [vmem:[#allocation8 + $0x14] sm:$0xf]
    %v414 = vld [vmem:[#allocation8 + $0x18] sm:$0xff]
    %v415 = vld [vmem:[#allocation8 + $0x20] sm:$0xf]
    %v416 = vld [vmem:[#allocation8 + $0x24] sm:$0xff]
    %v417 = vld [vmem:[#allocation8 + $0x2c] sm:$0xf]
    %v418 = vld [vmem:[#allocation8 + $0x30] sm:$0xff]
    %v419 = vld [vmem:[#allocation8 + $0x38] sm:$0xf]
    %v420 = vld [vmem:[#allocation8 + $0x3c] sm:$0xff]
    %v421 = vld [vmem:[#allocation8 + $0x44] sm:$0xf]
    %v422 = vld [vmem:[#allocation8 + $0x48] sm:$0xff]
    %v423 = vld [vmem:[#allocation8 + $0x50] sm:$0xf]
    %v424 = vld [vmem:[#allocation8 + $0x54] sm:$0xff]
    %v425 = vld [vmem:[#allocation8 + $0x5c] sm:$0xf]
    %v426 = vld [vmem:[#allocation8 + $0x60] sm:$0xff]
    %v427 = vld [vmem:[#allocation8 + $0x68] sm:$0xf]
    %v428 = vld [vmem:[#allocation8 + $0x6c] sm:$0xff]
    %v429 = vld [vmem:[#allocation8 + $0x74] sm:$0xf]
    %v430 = vld [vmem:[#allocation8 + $0x78] sm:$0xff]
    %v431 = vld [vmem:[#allocation8 + $0x80] sm:$0xf]
    %v432 = vld [vmem:[#allocation8 + $0x84] sm:$0xff]
    %v433 = vld [vmem:[#allocation8 + $0x8c] sm:$0xf]
    %v434 = vld [vmem:[#allocation8 + $0x90] sm:$0xff]
    %v435 = vld [vmem:[#allocation8 + $0x98] sm:$0xf]
    %v436 = vld [vmem:[#allocation8 + $0x9c] sm:$0xff]
    %v437 = vld [vmem:[#allocation8 + $0xa4] sm:$0xf]
    %v438 = vld [vmem:[#allocation8 + $0xa8] sm:$0xff]
    %v439 = vld [vmem:[#allocation8 + $0xb0] sm:$0xf]
    %v440 = vld [vmem:[#allocation8 + $0xb4] sm:$0xff]
    %v441 = vld [vmem:[#allocation8 + $0xbc] sm:$0xf]
    %v442 = vld [vmem:[#allocation8 + $0xc0] sm:$0xff]
    %v443 = vld [vmem:[#allocation8 + $0xc8] sm:$0xf]
    %v444 = vld [vmem:[#allocation8 + $0xcc] sm:$0xff]
    %v445 = vld [vmem:[#allocation8 + $0xd4] sm:$0xf]
    %v446 = vld [vmem:[#allocation8 + $0xd8] sm:$0xff]
    %v447 = vld [vmem:[#allocation8 + $0xe0] sm:$0xf]
    %v448 = vld [vmem:[#allocation8 + $0xe4] sm:$0xff]
    %v449 = vld [vmem:[#allocation8 + $0xec] sm:$0xf]
    %v450 = vld [vmem:[#allocation8 + $0xf0] sm:$0xff]
    %v451 = vld [vmem:[#allocation8 + $0xf8] sm:$0xf]
    %v452 = vld [vmem:[#allocation8 + $0xfc] sm:$0xff]
    %v453 = vld [vmem:[#allocation8 + $0x104] sm:$0xf]
    %v454 = vld [vmem:[#allocation8 + $0x108] sm:$0xff]
    %v455 = vld [vmem:[#allocation8 + $0x110] sm:$0xf]
    %v456 = vld [vmem:[#allocation8 + $0x114] sm:$0xff]
    %v457 = vld [vmem:[#allocation8 + $0x11c] sm:$0xf]
    %v458 = vld [vmem:[#allocation8 + $0x120] sm:$0xff]
    %v459 = vld [vmem:[#allocation8 + $0x128] sm:$0xf]
    %v460 = vld [vmem:[#allocation8 + $0x12c] sm:$0xff]
    %v461 = vld [vmem:[#allocation8 + $0x134] sm:$0xf]
    %v462 = vld [vmem:[#allocation8 + $0x138] sm:$0xff]
    %v463 = vld [vmem:[#allocation8 + $0x140] sm:$0xf]
    %v464 = vld [vmem:[#allocation8 + $0x144] sm:$0xff]
    %v465 = vld [vmem:[#allocation8 + $0x14c] sm:$0xf]
    %v466 = vld [vmem:[#allocation8 + $0x150] sm:$0xff]
    %v467 = vld [vmem:[#allocation8 + $0x158] sm:$0xf]
    %v468 = vld [vmem:[#allocation8 + $0x15c] sm:$0xff]
    %v469 = vld [vmem:[#allocation8 + $0x164] sm:$0xf]
    %v470 = vld [vmem:[#allocation8 + $0x168] sm:$0xff]
    %v471 = vld [vmem:[#allocation8 + $0x170] sm:$0xf]
    %v472 = vld [vmem:[#allocation8 + $0x174] sm:$0xff]
    %v473 = vld [vmem:[#allocation8 + $0x17c] sm:$0xf]
    %v474 = vld [vmem:[#allocation8 + $0x180] sm:$0xff]
    %v475 = vld [vmem:[#allocation8 + $0x188] sm:$0xf]
    %v476 = vld [vmem:[#allocation8 + $0x18c] sm:$0xff]
    %v477 = vld [vmem:[#allocation8 + $0x194] sm:$0xf]
    %v478 = vld [vmem:[#allocation8 + $0x198] sm:$0xff]
    %v479 = vld [vmem:[#allocation8 + $0x1a0] sm:$0xf]
    %v480 = vld [vmem:[#allocation8 + $0x1a4] sm:$0xff]
    %v481 = vld [vmem:[#allocation8 + $0x1ac] sm:$0xf]
    %v482 = vld [vmem:[#allocation8 + $0x1b0] sm:$0xff]
    %v483 = vld [vmem:[#allocation8 + $0x1b8] sm:$0xf]
    %v484 = vld [vmem:[#allocation8 + $0x1bc] sm:$0xff]
    %v485 = vld [vmem:[#allocation8 + $0x1c4] sm:$0xf]
    %v486 = vld [vmem:[#allocation8 + $0x1c8] sm:$0xff]
    %v487 = vld [vmem:[#allocation8 + $0x1d0] sm:$0xf]
    %v488 = vld [vmem:[#allocation8 + $0x1d4] sm:$0xff]
    %v489 = vld [vmem:[#allocation8 + $0x1dc] sm:$0xf]
    %v490 = vld [vmem:[#allocation8 + $0x1e0] sm:$0xff]
    %v491 = vld [vmem:[#allocation8 + $0x1e8] sm:$0xf]
    %v492 = vld [vmem:[#allocation8 + $0x1ec] sm:$0xff]
    %v493 = vld [vmem:[#allocation8 + $0x1f4] sm:$0xf]
    %v494 = vld [vmem:[#allocation8 + $0x1f8] sm:$0xff]
    %v495 = vld [vmem:[#allocation8 + $0x200] sm:$0xf]
    %v496 = vld [vmem:[#allocation8 + $0x204] sm:$0xff]
    %v497 = vld [vmem:[#allocation8 + $0x20c] sm:$0xf]
    %v498 = vld [vmem:[#allocation8 + $0x210] sm:$0xff]
    %v499 = vld [vmem:[#allocation8 + $0x218] sm:$0xf]
    %v500 = vld [vmem:[#allocation8 + $0x21c] sm:$0xff]
    %v501 = vld [vmem:[#allocation8 + $0x224] sm:$0xf]
    %v502 = vld [vmem:[#allocation8 + $0x228] sm:$0xff]
    %v503 = vld [vmem:[#allocation8 + $0x230] sm:$0xf]
    %v504 = vld [vmem:[#allocation8 + $0x234] sm:$0xff]
    %v505 = vld [vmem:[#allocation8 + $0x23c] sm:$0xf]
    %v506 = vld [vmem:[#allocation8 + $0x240] sm:$0xff]
    %v507 = vld [vmem:[#allocation8 + $0x248] sm:$0xf]
    %v508 = vld [vmem:[#allocation8 + $0x24c] sm:$0xff]
    %v509 = vld [vmem:[#allocation8 + $0x254] sm:$0xf]
    %v510 = vld [vmem:[#allocation8 + $0x258] sm:$0xff]
    %v511 = vld [vmem:[#allocation8 + $0x260] sm:$0xf]
    %v512 = vld [vmem:[#allocation8 + $0x264] sm:$0xff]
    %v513 = vld [vmem:[#allocation8 + $0x26c] sm:$0xf]
    %v514 = vld [vmem:[#allocation8 + $0x270] sm:$0xff]
    %v515 = vld [vmem:[#allocation8 + $0x278] sm:$0xf]
    %v516 = vld [vmem:[#allocation8 + $0x27c] sm:$0xff]
    %v517 = vld [vmem:[#allocation8 + $0x284] sm:$0xf]
    %v518 = vld [vmem:[#allocation8 + $0x288] sm:$0xff]
    %v519 = vld [vmem:[#allocation8 + $0x290] sm:$0xf]
    %v520 = vld [vmem:[#allocation8 + $0x294] sm:$0xff]
    %v521 = vld [vmem:[#allocation8 + $0x29c] sm:$0xf]
    %v522 = vld [vmem:[#allocation8 + $0x2a0] sm:$0xff]
    %v523 = vld [vmem:[#allocation8 + $0x2a8] sm:$0xf]
    %v524 = vld [vmem:[#allocation8 + $0x2ac] sm:$0xff]
    %v525 = vld [vmem:[#allocation8 + $0x2b4] sm:$0xf]
    %v526 = vld [vmem:[#allocation8 + $0x2b8] sm:$0xff]
    %v527 = vld [vmem:[#allocation8 + $0x2c0] sm:$0xf]
    %v528 = vld [vmem:[#allocation8 + $0x2c4] sm:$0xff]
    %v529 = vld [vmem:[#allocation8 + $0x2cc] sm:$0xf]
    %v530 = vld [vmem:[#allocation8 + $0x2d0] sm:$0xff]
    %v531 = vld [vmem:[#allocation8 + $0x2d8] sm:$0xf]
    %v532 = vld [vmem:[#allocation8 + $0x2dc] sm:$0xff]
    %v533 = vld [vmem:[#allocation8 + $0x2e4] sm:$0xf]
    %v534 = vld [vmem:[#allocation8 + $0x2e8] sm:$0xff]
    %v535 = vld [vmem:[#allocation8 + $0x2f0] sm:$0xf]
    %v536 = vld [vmem:[#allocation8 + $0x2f4] sm:$0xff]
    %v537 = vld [vmem:[#allocation8 + $0x2fc] sm:$0xf]
    %v538 = vld [vmem:[%s5] sm:$0x7]
    %v540 = vlaneseq
    %v541 = vshrl.u32 %v540, 7
    %v542 = vsub.s32 0, %v541
    %v543 = vrot.slane %v538, %v542
    %v544 = vlaneseq
    %v545 = vshrl.u32 %v544, 7
    %v546 = vsub.s32 1, %v545
    %v547 = vrot.slane %v538, %v546
    %v548 = vlaneseq
    %v549 = vshrl.u32 %v548, 7
    %v550 = vsub.s32 2, %v549
    %v551 = vrot.slane %v538, %v550
    %v683 = vunpack.c.l.b16 %v410
    %v684 = vunpack.c.h.b16 %v410
    %v685 = vunpack.c.l.b16 %v411
    %v686 = vunpack.c.l.b16 %v412
    %v687 = vunpack.c.h.b16 %v412
    %v688 = vunpack.c.l.b16 %v413
    %v689 = vunpack.c.l.b16 %v414
    %v690 = vunpack.c.h.b16 %v414
    %v691 = vunpack.c.l.b16 %v415
    %v692 = vunpack.c.l.b16 %v416
    %v693 = vunpack.c.h.b16 %v416
    %v694 = vunpack.c.l.b16 %v417
    %v695 = vunpack.c.l.b16 %v418
    %v696 = vunpack.c.h.b16 %v418
    %v697 = vunpack.c.l.b16 %v419
    %v698 = vunpack.c.l.b16 %v420
    %v699 = vunpack.c.h.b16 %v420
    %v700 = vunpack.c.l.b16 %v421
    %v701 = vunpack.c.l.b16 %v422
    %v702 = vunpack.c.h.b16 %v422
    %v703 = vunpack.c.l.b16 %v423
    %v704 = vunpack.c.l.b16 %v424
    %v705 = vunpack.c.h.b16 %v424
    %v706 = vunpack.c.l.b16 %v425
    %v707 = vunpack.c.l.b16 %v426
    %v708 = vunpack.c.h.b16 %v426
    %v709 = vunpack.c.l.b16 %v427
    %v710 = vunpack.c.l.b16 %v428
    %v711 = vunpack.c.h.b16 %v428
    %v712 = vunpack.c.l.b16 %v429
    %v713 = vunpack.c.l.b16 %v430
    %v714 = vunpack.c.h.b16 %v430
    %v715 = vunpack.c.l.b16 %v431
    %v716 = vunpack.c.l.b16 %v432
    %v717 = vunpack.c.h.b16 %v432
    %v718 = vunpack.c.l.b16 %v433
    %v719 = vunpack.c.l.b16 %v434
    %v720 = vunpack.c.h.b16 %v434
    %v721 = vunpack.c.l.b16 %v435
    %v722 = vunpack.c.l.b16 %v436
    %v723 = vunpack.c.h.b16 %v436
    %v724 = vunpack.c.l.b16 %v437
    %v725 = vunpack.c.l.b16 %v438
    %v726 = vunpack.c.h.b16 %v438
    %v727 = vunpack.c.l.b16 %v439
    %v728 = vunpack.c.l.b16 %v440
    %v729 = vunpack.c.h.b16 %v440
    %v730 = vunpack.c.l.b16 %v441
    %v731 = vunpack.c.l.b16 %v442
    %v732 = vunpack.c.h.b16 %v442
    %v733 = vunpack.c.l.b16 %v443
    %v734 = vunpack.c.l.b16 %v444
    %v735 = vunpack.c.h.b16 %v444
    %v736 = vunpack.c.l.b16 %v445
    %v737 = vunpack.c.l.b16 %v446
    %v738 = vunpack.c.h.b16 %v446
    %v739 = vunpack.c.l.b16 %v447
    %v740 = vunpack.c.l.b16 %v448
    %v741 = vunpack.c.h.b16 %v448
    %v742 = vunpack.c.l.b16 %v449
    %v743 = vunpack.c.l.b16 %v450
    %v744 = vunpack.c.h.b16 %v450
    %v745 = vunpack.c.l.b16 %v451
    %v746 = vunpack.c.l.b16 %v452
    %v747 = vunpack.c.h.b16 %v452
    %v748 = vunpack.c.l.b16 %v453
    %v749 = vunpack.c.l.b16 %v454
    %v750 = vunpack.c.h.b16 %v454
    %v751 = vunpack.c.l.b16 %v455
    %v752 = vunpack.c.l.b16 %v456
    %v753 = vunpack.c.h.b16 %v456
    %v754 = vunpack.c.l.b16 %v457
    %v755 = vunpack.c.l.b16 %v458
    %v756 = vunpack.c.h.b16 %v458
    %v757 = vunpack.c.l.b16 %v459
    %v758 = vunpack.c.l.b16 %v460
    %v759 = vunpack.c.h.b16 %v460
    %v760 = vunpack.c.l.b16 %v461
    %v761 = vunpack.c.l.b16 %v462
    %v762 = vunpack.c.h.b16 %v462
    %v763 = vunpack.c.l.b16 %v463
    %v764 = vunpack.c.l.b16 %v464
    %v765 = vunpack.c.h.b16 %v464
    %v766 = vunpack.c.l.b16 %v465
    %v767 = vunpack.c.l.b16 %v466
    %v768 = vunpack.c.h.b16 %v466
    %v769 = vunpack.c.l.b16 %v467
    %v770 = vunpack.c.l.b16 %v468
    %v771 = vunpack.c.h.b16 %v468
    %v772 = vunpack.c.l.b16 %v469
    %v773 = vunpack.c.l.b16 %v470
    %v774 = vunpack.c.h.b16 %v470
    %v775 = vunpack.c.l.b16 %v471
    %v776 = vunpack.c.l.b16 %v472
    %v777 = vunpack.c.h.b16 %v472
    %v778 = vunpack.c.l.b16 %v473
    %v779 = vunpack.c.l.b16 %v474
    %v780 = vunpack.c.h.b16 %v474
    %v781 = vunpack.c.l.b16 %v475
    %v782 = vunpack.c.l.b16 %v476
    %v783 = vunpack.c.h.b16 %v476
    %v784 = vunpack.c.l.b16 %v477
    %v785 = vunpack.c.l.b16 %v478
    %v786 = vunpack.c.h.b16 %v478
    %v787 = vunpack.c.l.b16 %v479
    %v788 = vunpack.c.l.b16 %v480
    %v789 = vunpack.c.h.b16 %v480
    %v790 = vunpack.c.l.b16 %v481
    %v791 = vunpack.c.l.b16 %v482
    %v792 = vunpack.c.h.b16 %v482
    %v793 = vunpack.c.l.b16 %v483
    %v794 = vunpack.c.l.b16 %v484
    %v795 = vunpack.c.h.b16 %v484
    %v796 = vunpack.c.l.b16 %v485
    %v797 = vunpack.c.l.b16 %v486
    %v798 = vunpack.c.h.b16 %v486
    %v799 = vunpack.c.l.b16 %v487
    %v800 = vunpack.c.l.b16 %v488
    %v801 = vunpack.c.h.b16 %v488
    %v802 = vunpack.c.l.b16 %v489
    %v803 = vunpack.c.l.b16 %v490
    %v804 = vunpack.c.h.b16 %v490
    %v805 = vunpack.c.l.b16 %v491
    %v806 = vunpack.c.l.b16 %v492
    %v807 = vunpack.c.h.b16 %v492
    %v808 = vunpack.c.l.b16 %v493
    %v809 = vunpack.c.l.b16 %v494
    %v810 = vunpack.c.h.b16 %v494
    %v811 = vunpack.c.l.b16 %v495
    %v812 = vunpack.c.l.b16 %v496
    %v813 = vunpack.c.h.b16 %v496
    %v814 = vunpack.c.l.b16 %v497
    %v815 = vunpack.c.l.b16 %v498
    %v816 = vunpack.c.h.b16 %v498
    %v817 = vunpack.c.l.b16 %v499
    %v818 = vunpack.c.l.b16 %v500
    %v819 = vunpack.c.h.b16 %v500
    %v820 = vunpack.c.l.b16 %v501
    %v821 = vunpack.c.l.b16 %v502
    %v822 = vunpack.c.h.b16 %v502
    %v823 = vunpack.c.l.b16 %v503
    %v824 = vunpack.c.l.b16 %v504
    %v825 = vunpack.c.h.b16 %v504
    %v826 = vunpack.c.l.b16 %v505
    %v827 = vunpack.c.l.b16 %v506
    %v828 = vunpack.c.h.b16 %v506
    %v829 = vunpack.c.l.b16 %v507
    %v830 = vunpack.c.l.b16 %v508
    %v831 = vunpack.c.h.b16 %v508
    %v832 = vunpack.c.l.b16 %v509
    %v833 = vunpack.c.l.b16 %v510
    %v834 = vunpack.c.h.b16 %v510
    %v835 = vunpack.c.l.b16 %v511
    %v836 = vunpack.c.l.b16 %v512
    %v837 = vunpack.c.h.b16 %v512
    %v838 = vunpack.c.l.b16 %v513
    %v839 = vunpack.c.l.b16 %v514
    %v840 = vunpack.c.h.b16 %v514
    %v841 = vunpack.c.l.b16 %v515
    %v842 = vunpack.c.l.b16 %v516
    %v843 = vunpack.c.h.b16 %v516
    %v844 = vunpack.c.l.b16 %v517
    %v845 = vunpack.c.l.b16 %v518
    %v846 = vunpack.c.h.b16 %v518
    %v847 = vunpack.c.l.b16 %v519
    %v848 = vunpack.c.l.b16 %v520
    %v849 = vunpack.c.h.b16 %v520
    %v850 = vunpack.c.l.b16 %v521
    %v851 = vunpack.c.l.b16 %v522
    %v852 = vunpack.c.h.b16 %v522
    %v853 = vunpack.c.l.b16 %v523
    %v854 = vunpack.c.l.b16 %v524
    %v855 = vunpack.c.h.b16 %v524
    %v856 = vunpack.c.l.b16 %v525
    %v857 = vunpack.c.l.b16 %v526
    %v858 = vunpack.c.h.b16 %v526
    %v859 = vunpack.c.l.b16 %v527
    %v860 = vunpack.c.l.b16 %v528
    %v861 = vunpack.c.h.b16 %v528
    %v862 = vunpack.c.l.b16 %v529
    %v863 = vunpack.c.l.b16 %v530
    %v864 = vunpack.c.h.b16 %v530
    %v865 = vunpack.c.l.b16 %v531
    %v866 = vunpack.c.l.b16 %v532
    %v867 = vunpack.c.h.b16 %v532
    %v868 = vunpack.c.l.b16 %v533
    %v869 = vunpack.c.l.b16 %v534
    %v870 = vunpack.c.h.b16 %v534
    %v871 = vunpack.c.l.b16 %v535
    %v872 = vunpack.c.l.b16 %v536
    %v873 = vunpack.c.h.b16 %v536
    %v874 = vunpack.c.l.b16 %v537
    %v875 = vpack.c.b16 %v686, %v683
    %v876 = vpack.c.b16 %v687, %v684
    %v877 = vpack.c.b16 %v688, %v685
    %v878 = vpack.c.b16 %v692, %v689
    %v879 = vpack.c.b16 %v693, %v690
    %v880 = vpack.c.b16 %v694, %v691
    %v881 = vpack.c.b16 %v698, %v695
    %v882 = vpack.c.b16 %v699, %v696
    %v883 = vpack.c.b16 %v700, %v697
    %v884 = vpack.c.b16 %v704, %v701
    %v885 = vpack.c.b16 %v705, %v702
    %v886 = vpack.c.b16 %v706, %v703
    %v887 = vpack.c.b16 %v710, %v707
    %v888 = vpack.c.b16 %v711, %v708
    %v889 = vpack.c.b16 %v712, %v709
    %v890 = vpack.c.b16 %v716, %v713
    %v891 = vpack.c.b16 %v717, %v714
    %v892 = vpack.c.b16 %v718, %v715
    %v893 = vpack.c.b16 %v722, %v719
    %v894 = vpack.c.b16 %v723, %v720
    %v895 = vpack.c.b16 %v724, %v721
    %v896 = vpack.c.b16 %v728, %v725
    %v897 = vpack.c.b16 %v729, %v726
    %v898 = vpack.c.b16 %v730, %v727
    %v899 = vpack.c.b16 %v734, %v731
    %v900 = vpack.c.b16 %v735, %v732
    %v901 = vpack.c.b16 %v736, %v733
    %v902 = vpack.c.b16 %v740, %v737
    %v903 = vpack.c.b16 %v741, %v738
    %v904 = vpack.c.b16 %v742, %v739
    %v905 = vpack.c.b16 %v746, %v743
    %v906 = vpack.c.b16 %v747, %v744
    %v907 = vpack.c.b16 %v748, %v745
    %v908 = vpack.c.b16 %v752, %v749
    %v909 = vpack.c.b16 %v753, %v750
    %v910 = vpack.c.b16 %v754, %v751
    %v911 = vpack.c.b16 %v758, %v755
    %v912 = vpack.c.b16 %v759, %v756
    %v913 = vpack.c.b16 %v760, %v757
    %v914 = vpack.c.b16 %v764, %v761
    %v915 = vpack.c.b16 %v765, %v762
    %v916 = vpack.c.b16 %v766, %v763
    %v917 = vpack.c.b16 %v770, %v767
    %v918 = vpack.c.b16 %v771, %v768
    %v919 = vpack.c.b16 %v772, %v769
    %v920 = vpack.c.b16 %v776, %v773
    %v921 = vpack.c.b16 %v777, %v774
    %v922 = vpack.c.b16 %v778, %v775
    %v923 = vpack.c.b16 %v782, %v779
    %v924 = vpack.c.b16 %v783, %v780
    %v925 = vpack.c.b16 %v784, %v781
    %v926 = vpack.c.b16 %v788, %v785
    %v927 = vpack.c.b16 %v789, %v786
    %v928 = vpack.c.b16 %v790, %v787
    %v929 = vpack.c.b16 %v794, %v791
    %v930 = vpack.c.b16 %v795, %v792
    %v931 = vpack.c.b16 %v796, %v793
    %v932 = vpack.c.b16 %v800, %v797
    %v933 = vpack.c.b16 %v801, %v798
    %v934 = vpack.c.b16 %v802, %v799
    %v935 = vpack.c.b16 %v806, %v803
    %v936 = vpack.c.b16 %v807, %v804
    %v937 = vpack.c.b16 %v808, %v805
    %v938 = vpack.c.b16 %v812, %v809
    %v939 = vpack.c.b16 %v813, %v810
    %v940 = vpack.c.b16 %v814, %v811
    %v941 = vpack.c.b16 %v818, %v815
    %v942 = vpack.c.b16 %v819, %v816
    %v943 = vpack.c.b16 %v820, %v817
    %v944 = vpack.c.b16 %v824, %v821
    %v945 = vpack.c.b16 %v825, %v822
    %v946 = vpack.c.b16 %v826, %v823
    %v947 = vpack.c.b16 %v830, %v827
    %v948 = vpack.c.b16 %v831, %v828
    %v949 = vpack.c.b16 %v832, %v829
    %v950 = vpack.c.b16 %v836, %v833
    %v951 = vpack.c.b16 %v837, %v834
    %v952 = vpack.c.b16 %v838, %v835
    %v953 = vpack.c.b16 %v842, %v839
    %v954 = vpack.c.b16 %v843, %v840
    %v955 = vpack.c.b16 %v844, %v841
    %v956 = vpack.c.b16 %v848, %v845
    %v957 = vpack.c.b16 %v849, %v846
    %v958 = vpack.c.b16 %v850, %v847
    %v959 = vpack.c.b16 %v854, %v851
    %v960 = vpack.c.b16 %v855, %v852
    %v961 = vpack.c.b16 %v856, %v853
    %v962 = vpack.c.b16 %v860, %v857
    %v963 = vpack.c.b16 %v861, %v858
    %v964 = vpack.c.b16 %v862, %v859
    %v965 = vpack.c.b16 %v866, %v863
    %v966 = vpack.c.b16 %v867, %v864
    %v967 = vpack.c.b16 %v868, %v865
    %v968 = vpack.c.b16 %v872, %v869
    %v969 = vpack.c.b16 %v873, %v870
    %v970 = vpack.c.b16 %v874, %v871
    %1067 = vmatprep.subr.bf16.mxu0 %v876
    %1068 = vmatpush1.bf16.msra.mxu0 %v875
    %1069 = vmatprep.subr.bf16.mxu0 %v879
    %1070 = vmatpush1.bf16.msra.mxu0 %v878
    %1071 = vmatprep.subr.bf16.mxu0 %v882
    %1072 = vmatpush1.bf16.msra.mxu0 %v881
    %1073 = vmatprep.subr.bf16.mxu0 %v885
    %1074 = vmatpush1.bf16.msra.mxu0 %v884
    %1075 = vmatprep.subr.bf16.mxu0 %v888
    %1076 = vmatpush1.bf16.msra.mxu0 %v887
    %1077 = vmatprep.subr.bf16.mxu0 %v891
    %1078 = vmatpush1.bf16.msra.mxu0 %v890
    %1079 = vmatprep.subr.bf16.mxu0 %v894
    %1080 = vmatpush1.bf16.msra.mxu0 %v893
    %1081 = vmatprep.subr.bf16.mxu0 %v897
    %1082 = vmatpush1.bf16.msra.mxu0 %v896
    %1083 = vmatprep.subr.bf16.mxu0 %v900
    %1084 = vmatpush1.bf16.msra.mxu0 %v899
    %1085 = vmatprep.subr.bf16.mxu0 %v903
    %1086 = vmatpush1.bf16.msra.mxu0 %v902
    %1087 = vmatprep.subr.bf16.mxu0 %v906
    %1088 = vmatpush1.bf16.msra.mxu0 %v905
    %1089 = vmatprep.subr.bf16.mxu0 %v909
    %1090 = vmatpush1.bf16.msra.mxu0 %v908
    %1091 = vmatprep.subr.bf16.mxu0 %v912
    %1092 = vmatpush1.bf16.msra.mxu0 %v911
    %1093 = vmatprep.subr.bf16.mxu0 %v915
    %1094 = vmatpush1.bf16.msra.mxu0 %v914
    %1095 = vmatprep.subr.bf16.mxu0 %v918
    %1096 = vmatpush1.bf16.msra.mxu0 %v917
    %1097 = vmatprep.subr.bf16.mxu0 %v921
    %1098 = vmatpush1.bf16.msra.mxu0 %v920
    %1099 = vmatprep.mubr.bf16.mxu0 %v407
    %1100 = vmatmul.mubr.bf16.gmra.mrb[0].mxu0 %v406
    %v1101 = vpop.f32.mrb[0].mxu0
    %v1102 = vadd.f32 %v543, %v1101
    %v1103 = vpop.f32.mrb[0].mxu0
    %v1104 = vadd.f32 %v547, %v1103
    %v1105 = vpop.f32.mrb[0].mxu0
    %v1106 = vpop.f32.mrb[0].mxu0
    %1107 = vdwg.mxu0
    %1108 = vmatprep.subr.bf16.mxu0 %v924
    %1109 = vmatpush1.bf16.msra.mxu0 %v923
    %1110 = vmatprep.subr.bf16.mxu0 %v927
    %1111 = vmatpush1.bf16.msra.mxu0 %v926
    %1112 = vmatprep.subr.bf16.mxu0 %v930
    %1113 = vmatpush1.bf16.msra.mxu0 %v929
    %1114 = vmatprep.subr.bf16.mxu0 %v933
    %1115 = vmatpush1.bf16.msra.mxu0 %v932
    %1116 = vmatprep.subr.bf16.mxu0 %v936
    %1117 = vmatpush1.bf16.msra.mxu0 %v935
    %1118 = vmatprep.subr.bf16.mxu0 %v939
    %1119 = vmatpush1.bf16.msra.mxu0 %v938
    %1120 = vmatprep.subr.bf16.mxu0 %v942
    %1121 = vmatpush1.bf16.msra.mxu0 %v941
    %1122 = vmatprep.subr.bf16.mxu0 %v945
    %1123 = vmatpush1.bf16.msra.mxu0 %v944
    %1124 = vmatprep.subr.bf16.mxu0 %v948
    %1125 = vmatpush1.bf16.msra.mxu0 %v947
    %1126 = vmatprep.subr.bf16.mxu0 %v951
    %1127 = vmatpush1.bf16.msra.mxu0 %v950
    %1128 = vmatprep.subr.bf16.mxu0 %v954
    %1129 = vmatpush1.bf16.msra.mxu0 %v953
    %1130 = vmatprep.subr.bf16.mxu0 %v957
    %1131 = vmatpush1.bf16.msra.mxu0 %v956
    %1132 = vmatprep.subr.bf16.mxu0 %v960
    %1133 = vmatpush1.bf16.msra.mxu0 %v959
    %1134 = vmatprep.subr.bf16.mxu0 %v963
    %1135 = vmatpush1.bf16.msra.mxu0 %v962
    %1136 = vmatprep.subr.bf16.mxu0 %v966
    %1137 = vmatpush1.bf16.msra.mxu0 %v965
    %1138 = vmatprep.subr.bf16.mxu0 %v969
    %1139 = vmatpush1.bf16.msra.mxu0 %v968
    %1140 = vmatprep.mubr.bf16.mxu0 %v409
    %1141 = vmatmul.mubr.bf16.gmra.mrb[0].mxu0 %v408
    %v1142 = vpop.f32.mrb[0].mxu0
    %v1143 = vadd.f32 %v1102, %v1142
    %v1144 = vpop.f32.mrb[0].mxu0
    %v1145 = vadd.f32 %v1104, %v1144
    %v1146 = vpop.f32.mrb[0].mxu0
    %v1147 = vpop.f32.mrb[0].mxu0
    %1148 = vdwg.mxu0
    %1149 = vmatprep.subr.bf16.mxu0 0
    %1150 = vmatpush1.bf16.msra.mxu0 %v877
    %1151 = vmatprep.subr.bf16.mxu0 0
    %1152 = vmatpush1.bf16.msra.mxu0 %v880
    %1153 = vmatprep.subr.bf16.mxu0 0
    %1154 = vmatpush1.bf16.msra.mxu0 %v883
    %1155 = vmatprep.subr.bf16.mxu0 0
    %1156 = vmatpush1.bf16.msra.mxu0 %v886
    %1157 = vmatprep.subr.bf16.mxu0 0
    %1158 = vmatpush1.bf16.msra.mxu0 %v889
    %1159 = vmatprep.subr.bf16.mxu0 0
    %1160 = vmatpush1.bf16.msra.mxu0 %v892
    %1161 = vmatprep.subr.bf16.mxu0 0
    %1162 = vmatpush1.bf16.msra.mxu0 %v895
    %1163 = vmatprep.subr.bf16.mxu0 0
    %1164 = vmatpush1.bf16.msra.mxu0 %v898
    %1165 = vmatprep.subr.bf16.mxu0 0
    %1166 = vmatpush1.bf16.msra.mxu0 %v901
    %1167 = vmatprep.subr.bf16.mxu0 0
    %1168 = vmatpush1.bf16.msra.mxu0 %v904
    %1169 = vmatprep.subr.bf16.mxu0 0
    %1170 = vmatpush1.bf16.msra.mxu0 %v907
    %1171 = vmatprep.subr.bf16.mxu0 0
    %1172 = vmatpush1.bf16.msra.mxu0 %v910
    %1173 = vmatprep.subr.bf16.mxu0 0
    %1174 = vmatpush1.bf16.msra.mxu0 %v913
    %1175 = vmatprep.subr.bf16.mxu0 0
    %1176 = vmatpush1.bf16.msra.mxu0 %v916
    %1177 = vmatprep.subr.bf16.mxu0 0
    %1178 = vmatpush1.bf16.msra.mxu0 %v919
    %1179 = vmatprep.subr.bf16.mxu0 0
    %1180 = vmatpush1.bf16.msra.mxu0 %v922
    %1181 = vmatprep.mubr.bf16.mxu0 %v407
    %1182 = vmatmul.mubr.bf16.gmra.mrb[0].mxu0 %v406
    %v1183 = vpop.f32.mrb[0].mxu0
    %v1184 = vadd.f32 %v551, %v1183
    %v1185 = vpop.f32.mrb[0].mxu0
    %v1186 = vpop.f32.mrb[0].mxu0
    %v1187 = vpop.f32.mrb[0].mxu0
    %1188 = vdwg.mxu0
    %1189 = vmatprep.subr.bf16.mxu0 0
    %1190 = vmatpush1.bf16.msra.mxu0 %v925
    %1191 = vmatprep.subr.bf16.mxu0 0
    %1192 = vmatpush1.bf16.msra.mxu0 %v928
    %1193 = vmatprep.subr.bf16.mxu0 0
    %1194 = vmatpush1.bf16.msra.mxu0 %v931
    %1195 = vmatprep.subr.bf16.mxu0 0
    %1196 = vmatpush1.bf16.msra.mxu0 %v934
    %1197 = vmatprep.subr.bf16.mxu0 0
    %1198 = vmatpush1.bf16.msra.mxu0 %v937
    %1199 = vmatprep.subr.bf16.mxu0 0
    %1200 = vmatpush1.bf16.msra.mxu0 %v940
    %1201 = vmatprep.subr.bf16.mxu0 0
    %1202 = vmatpush1.bf16.msra.mxu0 %v943
    %1203 = vmatprep.subr.bf16.mxu0 0
    %1204 = vmatpush1.bf16.msra.mxu0 %v946
    %1205 = vmatprep.subr.bf16.mxu0 0
    %1206 = vmatpush1.bf16.msra.mxu0 %v949
    %1207 = vmatprep.subr.bf16.mxu0 0
    %1208 = vmatpush1.bf16.msra.mxu0 %v952
    %1209 = vmatprep.subr.bf16.mxu0 0
    %1210 = vmatpush1.bf16.msra.mxu0 %v955
    %1211 = vmatprep.subr.bf16.mxu0 0
    %1212 = vmatpush1.bf16.msra.mxu0 %v958
    %1213 = vmatprep.subr.bf16.mxu0 0
    %1214 = vmatpush1.bf16.msra.mxu0 %v961
    %1215 = vmatprep.subr.bf16.mxu0 0
    %1216 = vmatpush1.bf16.msra.mxu0 %v964
    %1217 = vmatprep.subr.bf16.mxu0 0
    %1218 = vmatpush1.bf16.msra.mxu0 %v967
    %1219 = vmatprep.subr.bf16.mxu0 0
    %1220 = vmatpush1.bf16.msra.mxu0 %v970
    %1221 = vmatprep.mubr.bf16.mxu0 %v409
    %1222 = vmatmul.mubr.bf16.gmra.mrb[0].mxu0 %v408
    %v1223 = vpop.f32.mrb[0].mxu0
    %v1224 = vadd.f32 %v1184, %v1223
    %v1225 = vpop.f32.mrb[0].mxu0
    %v1226 = vpop.f32.mrb[0].mxu0
    %v1227 = vpop.f32.mrb[0].mxu0
    %1228 = vdwg.mxu0
    %v1229 = vmax.f32 %v1143, 0.0
    %v1230 = vmax.f32 %v1145, 0.0
    %v1231 = vmax.f32 %v1224, 0.0
    %v1232 = vpack.c.bf16 %v1229, %v1229
    %v1233 = vpack.c.bf16 %v1230, %v1230
    %v1234 = vpack.c.bf16 %v1231, %v1231
    %v1235 = vld [vmem:[#allocation9] sm:$0xf]
    %v1236 = vld [vmem:[#allocation9 + $0x4] sm:$0xf]
    %v1237 = vld [vmem:[#allocation9 + $0x8] sm:$0xf]
    %v1238 = vld [vmem:[#allocation9 + $0xc] sm:$0xf]
    %v1239 = vld [vmem:[#allocation9 + $0x10] sm:$0xf]
    %v1240 = vld [vmem:[#allocation9 + $0x14] sm:$0xf]
    %v1241 = vld [vmem:[#allocation9 + $0x18] sm:$0xf]
    %v1242 = vld [vmem:[#allocation9 + $0x1c] sm:$0xf]
    %v1243 = vld [vmem:[#allocation9 + $0x20] sm:$0xf]
    %v1244 = vld [vmem:[#allocation9 + $0x24] sm:$0xf]
    %v1245 = vld [vmem:[#allocation9 + $0x28] sm:$0xf]
    %v1246 = vld [vmem:[#allocation9 + $0x2c] sm:$0xf]
    %v1247 = vld [vmem:[#allocation9 + $0x30] sm:$0xf]
    %v1248 = vld [vmem:[#allocation9 + $0x34] sm:$0xf]
    %v1249 = vld [vmem:[#allocation9 + $0x38] sm:$0xf]
    %v1250 = vld [vmem:[#allocation9 + $0x3c] sm:$0xf]
    %v1251 = vld [vmem:[#allocation9 + $0x40] sm:$0xf]
    %v1252 = vld [vmem:[#allocation9 + $0x44] sm:$0xf]
    %v1253 = vld [vmem:[#allocation9 + $0x48] sm:$0xf]
    %v1254 = vld [vmem:[#allocation9 + $0x4c] sm:$0xf]
    %v1255 = vld [vmem:[#allocation9 + $0x50] sm:$0xf]
    %v1256 = vld [vmem:[#allocation9 + $0x54] sm:$0xf]
    %v1257 = vld [vmem:[#allocation9 + $0x58] sm:$0xf]
    %v1258 = vld [vmem:[#allocation9 + $0x5c] sm:$0xf]
    %v1259 = vld [vmem:[#allocation9 + $0x60] sm:$0xf]
    %v1260 = vld [vmem:[#allocation9 + $0x64] sm:$0xf]
    %v1261 = vld [vmem:[#allocation9 + $0x68] sm:$0xf]
    %v1262 = vld [vmem:[#allocation9 + $0x6c] sm:$0xf]
    %v1263 = vld [vmem:[#allocation9 + $0x70] sm:$0xf]
    %v1264 = vld [vmem:[#allocation9 + $0x74] sm:$0xf]
    %v1265 = vld [vmem:[#allocation9 + $0x78] sm:$0xf]
    %v1266 = vld [vmem:[#allocation9 + $0x7c] sm:$0xf]
    %v1267 = vld [vmem:[#allocation9 + $0x80] sm:$0xf]
    %v1268 = vld [vmem:[#allocation9 + $0x84] sm:$0xf]
    %v1269 = vld [vmem:[#allocation9 + $0x88] sm:$0xf]
    %v1270 = vld [vmem:[#allocation9 + $0x8c] sm:$0xf]
    %v1271 = vld [vmem:[#allocation9 + $0x90] sm:$0xf]
    %v1272 = vld [vmem:[#allocation9 + $0x94] sm:$0xf]
    %v1273 = vld [vmem:[#allocation9 + $0x98] sm:$0xf]
    %v1274 = vld [vmem:[#allocation9 + $0x9c] sm:$0xf]
    %v1275 = vld [vmem:[#allocation9 + $0xa0] sm:$0xf]
    %v1276 = vld [vmem:[#allocation9 + $0xa4] sm:$0xf]
    %v1277 = vld [vmem:[#allocation9 + $0xa8] sm:$0xf]
    %v1278 = vld [vmem:[#allocation9 + $0xac] sm:$0xf]
    %v1279 = vld [vmem:[#allocation9 + $0xb0] sm:$0xf]
    %v1280 = vld [vmem:[#allocation9 + $0xb4] sm:$0xf]
    %v1281 = vld [vmem:[#allocation9 + $0xb8] sm:$0xf]
    %v1282 = vld [vmem:[#allocation9 + $0xbc] sm:$0xf]
    %v1283 = vld [vmem:[%s7] sm:$0x1]
    %v1285 = vlaneseq
    %v1286 = vshrl.u32 %v1285, 7
    %v1287 = vsub.s32 0, %v1286
    %v1288 = vrot.slane %v1283, %v1287
    %v1338 = vunpack.c.l.b16 %v1235
    %v1339 = vunpack.c.l.b16 %v1236
    %v1340 = vunpack.c.l.b16 %v1237
    %v1341 = vunpack.c.l.b16 %v1238
    %v1342 = vunpack.c.l.b16 %v1239
    %v1343 = vunpack.c.l.b16 %v1240
    %v1344 = vunpack.c.l.b16 %v1241
    %v1345 = vunpack.c.l.b16 %v1242
    %v1346 = vunpack.c.l.b16 %v1243
    %v1347 = vunpack.c.l.b16 %v1244
    %v1348 = vunpack.c.l.b16 %v1245
    %v1349 = vunpack.c.l.b16 %v1246
    %v1350 = vunpack.c.l.b16 %v1247
    %v1351 = vunpack.c.l.b16 %v1248
    %v1352 = vunpack.c.l.b16 %v1249
    %v1353 = vunpack.c.l.b16 %v1250
    %v1354 = vunpack.c.l.b16 %v1251
    %v1355 = vunpack.c.l.b16 %v1252
    %v1356 = vunpack.c.l.b16 %v1253
    %v1357 = vunpack.c.l.b16 %v1254
    %v1358 = vunpack.c.l.b16 %v1255
    %v1359 = vunpack.c.l.b16 %v1256
    %v1360 = vunpack.c.l.b16 %v1257
    %v1361 = vunpack.c.l.b16 %v1258
    %v1362 = vunpack.c.l.b16 %v1259
    %v1363 = vunpack.c.l.b16 %v1260
    %v1364 = vunpack.c.l.b16 %v1261
    %v1365 = vunpack.c.l.b16 %v1262
    %v1366 = vunpack.c.l.b16 %v1263
    %v1367 = vunpack.c.l.b16 %v1264
    %v1368 = vunpack.c.l.b16 %v1265
    %v1369 = vunpack.c.l.b16 %v1266
    %v1370 = vunpack.c.l.b16 %v1267
    %v1371 = vunpack.c.l.b16 %v1268
    %v1372 = vunpack.c.l.b16 %v1269
    %v1373 = vunpack.c.l.b16 %v1270
    %v1374 = vunpack.c.l.b16 %v1271
    %v1375 = vunpack.c.l.b16 %v1272
    %v1376 = vunpack.c.l.b16 %v1273
    %v1377 = vunpack.c.l.b16 %v1274
    %v1378 = vunpack.c.l.b16 %v1275
    %v1379 = vunpack.c.l.b16 %v1276
    %v1380 = vunpack.c.l.b16 %v1277
    %v1381 = vunpack.c.l.b16 %v1278
    %v1382 = vunpack.c.l.b16 %v1279
    %v1383 = vunpack.c.l.b16 %v1280
    %v1384 = vunpack.c.l.b16 %v1281
    %v1385 = vunpack.c.l.b16 %v1282
    %v1386 = vpack.c.b16 %v1339, %v1338
    %v1387 = vpack.c.b16 %v1341, %v1340
    %v1388 = vpack.c.b16 %v1343, %v1342
    %v1389 = vpack.c.b16 %v1345, %v1344
    %v1390 = vpack.c.b16 %v1347, %v1346
    %v1391 = vpack.c.b16 %v1349, %v1348
    %v1392 = vpack.c.b16 %v1351, %v1350
    %v1393 = vpack.c.b16 %v1353, %v1352
    %v1394 = vpack.c.b16 %v1355, %v1354
    %v1395 = vpack.c.b16 %v1357, %v1356
    %v1396 = vpack.c.b16 %v1359, %v1358
    %v1397 = vpack.c.b16 %v1361, %v1360
    %v1398 = vpack.c.b16 %v1363, %v1362
    %v1399 = vpack.c.b16 %v1365, %v1364
    %v1400 = vpack.c.b16 %v1367, %v1366
    %v1401 = vpack.c.b16 %v1369, %v1368
    %v1402 = vpack.c.b16 %v1371, %v1370
    %v1403 = vpack.c.b16 %v1373, %v1372
    %v1404 = vpack.c.b16 %v1375, %v1374
    %v1405 = vpack.c.b16 %v1377, %v1376
    %v1406 = vpack.c.b16 %v1379, %v1378
    %v1407 = vpack.c.b16 %v1381, %v1380
    %v1408 = vpack.c.b16 %v1383, %v1382
    %v1409 = vpack.c.b16 %v1385, %v1384
    %1434 = vmatprep.subr.bf16.mxu0 0
    %1435 = vmatpush1.bf16.msra.mxu0 %v1386
    %1436 = vmatprep.subr.bf16.mxu0 0
    %1437 = vmatpush1.bf16.msra.mxu0 %v1387
    %1438 = vmatprep.subr.bf16.mxu0 0
    %1439 = vmatpush1.bf16.msra.mxu0 %v1388
    %1440 = vmatprep.subr.bf16.mxu0 0
    %1441 = vmatpush1.bf16.msra.mxu0 %v1389
    %1442 = vmatprep.subr.bf16.mxu0 0
    %1443 = vmatpush1.bf16.msra.mxu0 %v1390
    %1444 = vmatprep.subr.bf16.mxu0 0
    %1445 = vmatpush1.bf16.msra.mxu0 %v1391
    %1446 = vmatprep.subr.bf16.mxu0 0
    %1447 = vmatpush1.bf16.msra.mxu0 %v1392
    %1448 = vmatprep.subr.bf16.mxu0 0
    %1449 = vmatpush1.bf16.msra.mxu0 %v1393
    %1450 = vmatprep.subr.bf16.mxu0 0
    %1451 = vmatpush1.bf16.msra.mxu0 %v1394
    %1452 = vmatprep.subr.bf16.mxu0 0
    %1453 = vmatpush1.bf16.msra.mxu0 %v1395
    %1454 = vmatprep.subr.bf16.mxu0 0
    %1455 = vmatpush1.bf16.msra.mxu0 %v1396
    %1456 = vmatprep.subr.bf16.mxu0 0
    %1457 = vmatpush1.bf16.msra.mxu0 %v1397
    %1458 = vmatprep.subr.bf16.mxu0 0
    %1459 = vmatpush1.bf16.msra.mxu0 %v1398
    %1460 = vmatprep.subr.bf16.mxu0 0
    %1461 = vmatpush1.bf16.msra.mxu0 %v1399
    %1462 = vmatprep.subr.bf16.mxu0 0
    %1463 = vmatpush1.bf16.msra.mxu0 %v1400
    %1464 = vmatprep.subr.bf16.mxu0 0
    %1465 = vmatpush1.bf16.msra.mxu0 %v1401
    %1466 = vmatprep.mubr.bf16.mxu0 %v1233
    %1467 = vmatmul.mubr.bf16.gmra.mrb[0].mxu0 %v1232
    %v1468 = vpop.f32.mrb[0].mxu0
    %v1469 = vadd.f32 %v1288, %v1468
    %v1470 = vpop.f32.mrb[0].mxu0
    %v1471 = vpop.f32.mrb[0].mxu0
    %v1472 = vpop.f32.mrb[0].mxu0
    %1473 = vdwg.mxu0
    %1474 = vmatprep.subr.bf16.mxu0 0
    %1475 = vmatpush1.bf16.msra.mxu0 %v1402
    %1476 = vmatprep.subr.bf16.mxu0 0
    %1477 = vmatpush1.bf16.msra.mxu0 %v1403
    %1478 = vmatprep.subr.bf16.mxu0 0
    %1479 = vmatpush1.bf16.msra.mxu0 %v1404
    %1480 = vmatprep.subr.bf16.mxu0 0
    %1481 = vmatpush1.bf16.msra.mxu0 %v1405
    %1482 = vmatprep.subr.bf16.mxu0 0
    %1483 = vmatpush1.bf16.msra.mxu0 %v1406
    %1484 = vmatprep.subr.bf16.mxu0 0
    %1485 = vmatpush1.bf16.msra.mxu0 %v1407
    %1486 = vmatprep.subr.bf16.mxu0 0
    %1487 = vmatpush1.bf16.msra.mxu0 %v1408
    %1488 = vmatprep.subr.bf16.mxu0 0
    %1489 = vmatpush1.bf16.msra.mxu0 %v1409
    %1490 = vmatprep.subr.bf16.mxu0 0
    %1491 = vmatpush1.bf16.msra.mxu0 0
    %1492 = vmatprep.subr.bf16.mxu0 0
    %1493 = vmatpush1.bf16.msra.mxu0 0
    %1494 = vmatprep.subr.bf16.mxu0 0
    %1495 = vmatpush1.bf16.msra.mxu0 0
    %1496 = vmatprep.subr.bf16.mxu0 0
    %1497 = vmatpush1.bf16.msra.mxu0 0
    %1498 = vmatprep.subr.bf16.mxu0 0
    %1499 = vmatpush1.bf16.msra.mxu0 0
    %1500 = vmatprep.subr.bf16.mxu0 0
    %1501 = vmatpush1.bf16.msra.mxu0 0
    %1502 = vmatprep.subr.bf16.mxu0 0
    %1503 = vmatpush1.bf16.msra.mxu0 0
    %1504 = vmatprep.subr.bf16.mxu0 0
    %1505 = vmatpush1.bf16.msra.mxu0 0
    %1506 = vmatprep.mubr.bf16.mxu0 0
    %1507 = vmatmul.mubr.bf16.gmra.mrb[0].mxu0 %v1234
    %v1508 = vpop.f32.mrb[0].mxu0
    %v1509 = vadd.f32 %v1469, %v1508
    %v1510 = vpop.f32.mrb[0].mxu0
    %v1511 = vpop.f32.mrb[0].mxu0
    %v1512 = vpop.f32.mrb[0].mxu0
    %1513 = vdwg.mxu0
    %v1514 = vmax.f32 %v1509, 0.0
    %v1515 = vpack.c.bf16 %v1514, %v1514
    %v1516 = vld [vmem:[#allocation11] sm:$0xf]
    %v1517 = vld [vmem:[#allocation11 + $0x4] sm:$0xf]
    %v1518 = vld [vmem:[#allocation11 + $0x8] sm:$0xf]
    %v1519 = vld [vmem:[#allocation11 + $0xc] sm:$0xf]
    %v1520 = vld [vmem:[#allocation11 + $0x10] sm:$0xf]
    %v1521 = vld [vmem:[#allocation11 + $0x14] sm:$0xf]
    %v1522 = vld [vmem:[#allocation11 + $0x18] sm:$0xf]
    %v1523 = vld [vmem:[#allocation11 + $0x1c] sm:$0xf]
    %v1524 = vld [vmem:[#allocation11 + $0x20] sm:$0xf]
    %v1525 = vld [vmem:[#allocation11 + $0x24] sm:$0xf]
    %v1526 = vld [vmem:[#allocation11 + $0x28] sm:$0xf]
    %v1527 = vld [vmem:[#allocation11 + $0x2c] sm:$0xf]
    %v1528 = vld [vmem:[#allocation11 + $0x30] sm:$0xf]
    %v1529 = vld [vmem:[#allocation11 + $0x34] sm:$0xf]
    %v1530 = vld [vmem:[#allocation11 + $0x38] sm:$0xf]
    %v1531 = vld [vmem:[#allocation11 + $0x3c] sm:$0xf]
    %v1532 = vld [vmem:[%s9] sm:$0x1]
    %v1534 = vlaneseq
    %v1535 = vshrl.u32 %v1534, 7
    %v1536 = vsub.s32 0, %v1535
    %v1537 = vrot.slane %v1532, %v1536
    %v1555 = vunpack.c.l.b16 %v1516
    %v1556 = vunpack.c.l.b16 %v1517
    %v1557 = vunpack.c.l.b16 %v1518
    %v1558 = vunpack.c.l.b16 %v1519
    %v1559 = vunpack.c.l.b16 %v1520
    %v1560 = vunpack.c.l.b16 %v1521
    %v1561 = vunpack.c.l.b16 %v1522
    %v1562 = vunpack.c.l.b16 %v1523
    %v1563 = vunpack.c.l.b16 %v1524
    %v1564 = vunpack.c.l.b16 %v1525
    %v1565 = vunpack.c.l.b16 %v1526
    %v1566 = vunpack.c.l.b16 %v1527
    %v1567 = vunpack.c.l.b16 %v1528
    %v1568 = vunpack.c.l.b16 %v1529
    %v1569 = vunpack.c.l.b16 %v1530
    %v1570 = vunpack.c.l.b16 %v1531
    %v1571 = vpack.c.b16 %v1556, %v1555
    %v1572 = vpack.c.b16 %v1558, %v1557
    %v1573 = vpack.c.b16 %v1560, %v1559
    %v1574 = vpack.c.b16 %v1562, %v1561
    %v1575 = vpack.c.b16 %v1564, %v1563
    %v1576 = vpack.c.b16 %v1566, %v1565
    %v1577 = vpack.c.b16 %v1568, %v1567
    %v1578 = vpack.c.b16 %v1570, %v1569
    %1587 = vmatprep.subr.bf16.mxu0 0
    %1588 = vmatpush1.bf16.msra.mxu0 %v1571
    %1589 = vmatprep.subr.bf16.mxu0 0
    %1590 = vmatpush1.bf16.msra.mxu0 %v1572
    %1591 = vmatprep.subr.bf16.mxu0 0
    %1592 = vmatpush1.bf16.msra.mxu0 %v1573
    %1593 = vmatprep.subr.bf16.mxu0 0
    %1594 = vmatpush1.bf16.msra.mxu0 %v1574
    %1595 = vmatprep.subr.bf16.mxu0 0
    %1596 = vmatpush1.bf16.msra.mxu0 %v1575
    %1597 = vmatprep.subr.bf16.mxu0 0
    %1598 = vmatpush1.bf16.msra.mxu0 %v1576
    %1599 = vmatprep.subr.bf16.mxu0 0
    %1600 = vmatpush1.bf16.msra.mxu0 %v1577
    %1601 = vmatprep.subr.bf16.mxu0 0
    %1602 = vmatpush1.bf16.msra.mxu0 %v1578
    %1603 = vmatprep.subr.bf16.mxu0 0
    %1604 = vmatpush1.bf16.msra.mxu0 0
    %1605 = vmatprep.subr.bf16.mxu0 0
    %1606 = vmatpush1.bf16.msra.mxu0 0
    %1607 = vmatprep.subr.bf16.mxu0 0
    %1608 = vmatpush1.bf16.msra.mxu0 0
    %1609 = vmatprep.subr.bf16.mxu0 0
    %1610 = vmatpush1.bf16.msra.mxu0 0
    %1611 = vmatprep.subr.bf16.mxu0 0
    %1612 = vmatpush1.bf16.msra.mxu0 0
    %1613 = vmatprep.subr.bf16.mxu0 0
    %1614 = vmatpush1.bf16.msra.mxu0 0
    %1615 = vmatprep.subr.bf16.mxu0 0
    %1616 = vmatpush1.bf16.msra.mxu0 0
    %1617 = vmatprep.subr.bf16.mxu0 0
    %1618 = vmatpush1.bf16.msra.mxu0 0
    %1619 = vmatprep.mubr.bf16.mxu0 0
    %1620 = vmatmul.mubr.bf16.gmra.mrb[0].mxu0 %v1515
    %v1621 = vpop.f32.mrb[0].mxu0
    %v1622 = vadd.f32 %v1537, %v1621
    %v1623 = vpop.f32.mrb[0].mxu0
    %v1624 = vpop.f32.mrb[0].mxu0
    %v1625 = vpop.f32.mrb[0].mxu0
    %1626 = vdwg.mxu0
    %v1627 = vtanh.pop %v1622
    %v1628 = vstv %s104
    %v1629 = vmul.f32 %v1627, %v1628
    %1630 = vst [vmem:[#allocation12] sm:$0xff] %v1629
    // Predicated region
    $region62: #{tpu_custom_call.1} parent=1 // pred_check
      _
    $region63: #{tpu_custom_call.1} parent=1 // pred_check_branch
      %1632 = sbr.rel (0) target = $region65
    $region64: #{tpu_custom_call.1} parent=1 // pred_region
      %s1634 = ssub.s32 128, 128
      %1635 = vsyncadd [#allocation5], %s1634
      %s1637 = sshll.u32 [#allocation12], 4
      %s1638 = int_to_ptr.vmem [resolvable:$true] %s1637
      %1640 = dma.vmem_to_hbm [thread:$0]  %s1638, 128, %s10, [#allocation5]
    $region65: #{tpu_custom_call.1} parent=1 // pred_fallthru
      _
    // Predicated region
    $region66: #{tpu_custom_call.1} parent=1 // pred_check
      _
    $region67: #{tpu_custom_call.1} parent=1 // pred_check_branch
      %1642 = sbr.rel (0) target = $region69
    $region68: #{tpu_custom_call.1} parent=1 // pred_region
      %1643 = dma.done [#allocation5], 128
    $region69: #{tpu_custom_call.1} parent=1 // pred_fallthru
      _
    %1644 = vsyncpa [#allocation4], 1
    %1645 = vsyncpa [#allocation7], 1
    %1646 = vsyncpa [#allocation10], 1
    %1647 = vsyncpa [#allocation5], 1

</llo_original>
